<compile_context>
chip_gen: v7x
topology: tpu7x:2x2x1
jax: 0.10.0
libtpu: 0.0.40
codegen_flags: <defaults>
</compile_context>

<pallas_src>
import functools

import jax
import jax.numpy as jnp
from jax.experimental import pallas as pl
from jax.experimental.pallas import tpu as pltpu


def _round_up(n, m):
    return -(-n // m) * m


def _compl_mul_kernel(ar_ref, ai_ref, wr_ref, wi_ref, or_ref, oi_ref):
    """Complex channel contraction for one (corner, Cout-tile, M-tile) block.

    ar/ai : (1, Cin, B,   tm)  real / imag of the x_ft corner (lane-dense M tile)
    wr/wi : (1, Cin, tco, tm)  real / imag of the weight tile
    or/oi : (1, B,   tco, tm)
    out[b,o,m] = sum_i a[i,b,m] * w[i,o,m]   (complex)

    Accumulates over Cin in registers (live intermediate is only 2 x (B,tco,tm))
    and writes each output tile exactly once (single store per output — friendly
    to v5e's single vector-store slot).
    """
    cin = ar_ref.shape[1]
    acc_r = None
    acc_i = None
    for i in range(cin):                      # Cin is a small static constant; unrolled
        ar_i = ar_ref[0, i, :, :]             # (B, tm)
        ai_i = ai_ref[0, i, :, :]
        wr_i = wr_ref[0, i, :, :]             # (tco, tm)
        wi_i = wi_ref[0, i, :, :]

        # Gauss 3-multiply complex product:
        #   k1 = wr*(ar+ai); k2 = ar*(wi-wr); k3 = ai*(wr+wi)
        #   real = k1 - k3 ; imag = k1 + k2
        s_i = (ar_i + ai_i)[:, None, :]       # shared over the Cout broadcast
        a_r = ar_i[:, None, :]
        a_i = ai_i[:, None, :]
        w_r = wr_i[None, :, :]
        w_d = (wi_i - wr_i)[None, :, :]       # shared over the B broadcast
        w_s = (wr_i + wi_i)[None, :, :]

        k1 = s_i * w_r                        # only 3 (B,tco,tm) multiplies per i
        k2 = a_r * w_d
        k3 = a_i * w_s
        r_i = k1 - k3
        im_i = k1 + k2
        if acc_r is None:
            acc_r, acc_i = r_i, im_i
        else:
            acc_r = acc_r + r_i
            acc_i = acc_i + im_i

    or_ref[0] = acc_r
    oi_ref[0] = acc_i


def _choose_tiles(b, cin, cout_pad, mp, block_budget_bytes=24 * 1024 * 1024):
    """Pick (tco, tm) so the double-buffered working set stays well under VMEM
    (budget chosen to be safe on v7x's 64 MiB as well as v5e/v6e)."""
    tm_opts = [t for t in (1024, 512, 256, 128) if mp % t == 0] or [mp]
    tco_opts = [t for t in (64, 32, 16, 8) if cout_pad % t == 0] or [cout_pad]
    for tm in tm_opts:
        for tco in tco_opts:
            blk = 4 * 2 * (cin * b * tm + cin * tco * tm + b * tco * tm)  # f32, re+im
            if 2 * blk <= block_budget_bytes:      # x2 for double buffering
                return tco, tm
    return tco_opts[-1], tm_opts[-1]


def _compl_mul_pallas(ar, ai, wr, wi):
    """ar/ai: (4,Cin,B,Mp), wr/wi: (4,Cin,Cout_pad,Mp) -> (4,B,Cout_pad,Mp) x2."""
    g, cin, b, mp = ar.shape
    cout_pad = wr.shape[2]
    tco, tm = _choose_tiles(b, cin, cout_pad, mp)

    a_spec = pl.BlockSpec((1, cin, b, tm), lambda gi, ci, mi: (gi, 0, 0, mi))
    w_spec = pl.BlockSpec((1, cin, tco, tm), lambda gi, ci, mi: (gi, 0, ci, mi))
    o_spec = pl.BlockSpec((1, b, tco, tm), lambda gi, ci, mi: (gi, 0, ci, mi))

    out_r, out_i = pl.pallas_call(
        _compl_mul_kernel,
        out_shape=(
            jax.ShapeDtypeStruct((g, b, cout_pad, mp), jnp.float32),
            jax.ShapeDtypeStruct((g, b, cout_pad, mp), jnp.float32),
        ),
        grid=(g, cout_pad // tco, mp // tm),
        in_specs=[a_spec, a_spec, w_spec, w_spec],
        out_specs=(o_spec, o_spec),
        compiler_params=pltpu.CompilerParams(
            # every output block is written exactly once -> all axes parallel
            # (corner x Cout-tile x M-tile also gives the v7x megacore extent to shard)
            dimension_semantics=("parallel", "parallel", "parallel"),
            vmem_limit_bytes=48 * 1024 * 1024,
        ),
    )(ar, ai, wr, wi)
    return out_r, out_i


def pack_spectral_weights(w1, w2, w3, w4):
    """Pre-pack the 4 corner weights once, outside the per-step hot path.

    Each wK: (Cin, Cout, m1, m2, m3, 2)  ->  (wr, wi): (4, Cin, Cout_pad, Mp) f32,
    with Cout padded to a multiple of 8 (sublanes) and M to a multiple of 128 (lanes).
    Zero padding contributes zero output and is sliced off in the forward pass.
    """
    cin, cout, m1, m2, m3, _ = w1.shape
    m = m1 * m2 * m3
    mp = _round_up(m, 128)
    cout_pad = _round_up(cout, 8)
    w = jnp.stack([w1, w2, w3, w4], axis=0).astype(jnp.float32)   # (4,Cin,Cout,m1,m2,m3,2)
    w = w.reshape(4, cin, cout, m, 2)
    w = jnp.pad(w, [(0, 0), (0, 0), (0, cout_pad - cout), (0, mp - m), (0, 0)])
    return w[..., 0], w[..., 1]


@functools.partial(
    jax.jit, static_argnames=("modes1", "modes2", "modes3", "out_channels"))
def spectral_conv3d_fast(x, wr, wi, *, modes1, modes2, modes3, out_channels):
    """Forward pass of SpectralConv3d_fast.

    x       : (B, Cin, D1, D2, D3) float32
    wr, wi  : (4, Cin, Cout_pad, Mp) float32 from pack_spectral_weights(...)
    returns (B, Cout, D1, D2, D3) float32
    (The original PyTorch code allocates out_ft with in_channels; it only works
     when in_channels == out_channels, which we assert here.)
    """
    b, cin, d1, d2, d3 = x.shape
    m1, m2, m3 = modes1, modes2, modes3
    m = m1 * m2 * m3
    mp = wr.shape[-1]
    cout = out_channels
    d3h = d3 // 2 + 1

    assert cin == cout, "module assumes in_channels == out_channels"
    assert d1 >= 2 * m1 and d2 >= 2 * m2 and m3 <= d3h, "frequency corners overlap"

    # rfft over the last 3 dims, normalized == ortho
    x_ft = jnp.fft.rfftn(x.astype(jnp.float32), axes=(-3, -2, -1), norm="ortho")

    # TODO(synk): the corner gather could be fused into the pallas_call via per-corner
    # index_maps on the full (B,Cin,D1,D2,D3h) spectrum; kept in XLA for simplicity.
    corners = jnp.stack(
        [
            x_ft[:, :, :m1, :m2, :m3],
            x_ft[:, :, d1 - m1:, :m2, :m3],
            x_ft[:, :, :m1, d2 - m2:, :m3],
            x_ft[:, :, d1 - m1:, d2 - m2:, :m3],
        ],
        axis=0,
    )                                                       # (4, B, Cin, m1, m2, m3)
    a = jnp.swapaxes(corners.reshape(4, b, cin, m), 1, 2)   # (4, Cin, B, M)
    ar = jnp.real(a).astype(jnp.float32)
    ai = jnp.imag(a).astype(jnp.float32)
    if mp > m:  # lane-dense pad; zero modes contribute nothing and are sliced below
        pad = [(0, 0), (0, 0), (0, 0), (0, mp - m)]
        ar = jnp.pad(ar, pad)
        ai = jnp.pad(ai, pad)

    out_r, out_i = _compl_mul_pallas(ar, ai, wr, wi)        # (4, B, Cout_pad, Mp)
    out_c = (out_r[:, :, :cout, :m] + 1j * out_i[:, :, :cout, :m]).astype(jnp.complex64)
    out_c = out_c.reshape(4, b, cout, m1, m2, m3)

    # scatter into the (otherwise zero) full spectrum and invert
    out_ft = jnp.zeros((b, cout, d1, d2, d3h), jnp.complex64)
    out_ft = out_ft.at[:, :, :m1, :m2, :m3].set(out_c[0])
    out_ft = out_ft.at[:, :, d1 - m1:, :m2, :m3].set(out_c[1])
    out_ft = out_ft.at[:, :, :m1, d2 - m2:, :m3].set(out_c[2])
    out_ft = out_ft.at[:, :, d1 - m1:, d2 - m2:, :m3].set(out_c[3])

    y = jnp.fft.irfftn(out_ft, s=(d1, d2, d3), axes=(-3, -2, -1), norm="ortho")
    return y.astype(jnp.float32)


def _reference(x, w1, w2, w3, w4, m1, m2, m3):
    """Pure-JAX reference mirroring the PyTorch forward (for correctness check)."""
    b, cin, d1, d2, d3 = x.shape
    cout = w1.shape[1]
    d3h = d3 // 2 + 1
    x_ft = jnp.fft.rfftn(x, axes=(-3, -2, -1), norm="ortho")

    def cmul(a, w):  # a: (B,Cin,x,y,z) complex, w: (Cin,Cout,x,y,z,2)
        wc = w[..., 0] + 1j * w[..., 1]
        return jnp.einsum("bixyz,ioxyz->boxyz", a, wc.astype(jnp.complex64))

    out_ft = jnp.zeros((b, cout, d1, d2, d3h), jnp.complex64)
    out_ft = out_ft.at[:, :, :m1, :m2, :m3].set(cmul(x_ft[:, :, :m1, :m2, :m3], w1))
    out_ft = out_ft.at[:, :, d1 - m1:, :m2, :m3].set(cmul(x_ft[:, :, d1 - m1:, :m2, :m3], w2))
    out_ft = out_ft.at[:, :, :m1, d2 - m2:, :m3].set(cmul(x_ft[:, :, :m1, d2 - m2:, :m3], w3))
    out_ft = out_ft.at[:, :, d1 - m1:, d2 - m2:, :m3].set(
        cmul(x_ft[:, :, d1 - m1:, d2 - m2:, :m3], w4))
    return jnp.fft.irfftn(out_ft, s=(d1, d2, d3), axes=(-3, -2, -1), norm="ortho")


if __name__ == "__main__":
    # Small, deterministic configuration (in_channels == out_channels, as the
    # original module implicitly requires).
    B, Cin, Cout = 2, 4, 4
    D1 = D2 = D3 = 16
    m1 = m2 = m3 = 4
    scale = 1.0 / (Cin * Cout)

    key = jax.random.PRNGKey(0)
    kx, k1, k2, k3, k4 = jax.random.split(key, 5)
    x = jax.random.normal(kx, (B, Cin, D1, D2, D3), dtype=jnp.float32)
    wshape = (Cin, Cout, m1, m2, m3, 2)
    w1 = scale * jax.random.uniform(k1, wshape, dtype=jnp.float32)
    w2 = scale * jax.random.uniform(k2, wshape, dtype=jnp.float32)
    w3 = scale * jax.random.uniform(k3, wshape, dtype=jnp.float32)
    w4 = scale * jax.random.uniform(k4, wshape, dtype=jnp.float32)

    # Weights are parameters: pack/pad them once, outside the jitted hot path.
    wr_packed, wi_packed = pack_spectral_weights(w1, w2, w3, w4)
    wr_packed = jax.block_until_ready(wr_packed)
    wi_packed = jax.block_until_ready(wi_packed)

    y = spectral_conv3d_fast(
        x, wr_packed, wi_packed,
        modes1=m1, modes2=m2, modes3=m3, out_channels=Cout)
    y = jax.block_until_ready(y)

    y_ref = jax.block_until_ready(_reference(x, w1, w2, w3, w4, m1, m2, m3))
    assert y.shape == (B, Cout, D1, D2, D3)
    assert jnp.allclose(y, y_ref, atol=1e-4, rtol=1e-4), "mismatch vs reference"

    print("KERNEL_OK")
</pallas_src>

<mosaic_0001>
module attributes {stable_mosaic.version = 11 : i64} {
  func.func @_compl_mul_kernel(%arg0: i32, %arg1: i32, %arg2: i32, %arg3: memref<1x4x2x128xf32, #tpu.memory_space<vmem>>, %arg4: memref<1x4x2x128xf32, #tpu.memory_space<vmem>>, %arg5: memref<1x4x8x128xf32, #tpu.memory_space<vmem>>, %arg6: memref<1x4x8x128xf32, #tpu.memory_space<vmem>>, %arg7: memref<1x2x8x128xf32, #tpu.memory_space<vmem>>, %arg8: memref<1x2x8x128xf32, #tpu.memory_space<vmem>>) attributes {dimension_semantics = [#tpu.dimension_semantics<parallel>, #tpu.dimension_semantics<parallel>, #tpu.dimension_semantics<parallel>], iteration_bounds = array<i64: 4, 1, 1>, scalar_prefetch = 0 : i64, scratch_operands = 0 : i64, tpu.core_type = #tpu.core_type<tc>, window_params = [{transform_indices = @transform_0, window_bounds = array<i64: 1, 4, 2, 128>}, {transform_indices = @transform_1, window_bounds = array<i64: 1, 4, 2, 128>}, {transform_indices = @transform_2, window_bounds = array<i64: 1, 4, 8, 128>}, {transform_indices = @transform_3, window_bounds = array<i64: 1, 4, 8, 128>}, {transform_indices = @transform_4, window_bounds = array<i64: 1, 2, 8, 128>}, {transform_indices = @transform_5, window_bounds = array<i64: 1, 2, 8, 128>}]} {
    %c0 = arith.constant 0 : index
    %c0_0 = arith.constant 0 : index
    %c0_1 = arith.constant 0 : index
    %c0_2 = arith.constant 0 : index
    %0 = vector.load %arg3[%c0, %c0_0, %c0_1, %c0_2] : memref<1x4x2x128xf32, #tpu.memory_space<vmem>>, vector<1x1x2x128xf32>
    %1 = vector.shape_cast %0 : vector<1x1x2x128xf32> to vector<2x128xf32>
    %c0_3 = arith.constant 0 : index
    %c0_4 = arith.constant 0 : index
    %c0_5 = arith.constant 0 : index
    %c0_6 = arith.constant 0 : index
    %2 = vector.load %arg4[%c0_3, %c0_4, %c0_5, %c0_6] : memref<1x4x2x128xf32, #tpu.memory_space<vmem>>, vector<1x1x2x128xf32>
    %3 = vector.shape_cast %2 : vector<1x1x2x128xf32> to vector<2x128xf32>
    %c0_7 = arith.constant 0 : index
    %c0_8 = arith.constant 0 : index
    %c0_9 = arith.constant 0 : index
    %c0_10 = arith.constant 0 : index
    %4 = vector.load %arg5[%c0_7, %c0_8, %c0_9, %c0_10] : memref<1x4x8x128xf32, #tpu.memory_space<vmem>>, vector<1x1x8x128xf32>
    %5 = vector.shape_cast %4 : vector<1x1x8x128xf32> to vector<8x128xf32>
    %c0_11 = arith.constant 0 : index
    %c0_12 = arith.constant 0 : index
    %c0_13 = arith.constant 0 : index
    %c0_14 = arith.constant 0 : index
    %6 = vector.load %arg6[%c0_11, %c0_12, %c0_13, %c0_14] : memref<1x4x8x128xf32, #tpu.memory_space<vmem>>, vector<1x1x8x128xf32>
    %7 = vector.shape_cast %6 : vector<1x1x8x128xf32> to vector<8x128xf32>
    %8 = arith.addf %1, %3 : vector<2x128xf32>
    %9 = vector.shape_cast %8 : vector<2x128xf32> to vector<2x1x128xf32>
    %10 = vector.shape_cast %1 : vector<2x128xf32> to vector<2x1x128xf32>
    %11 = vector.shape_cast %3 : vector<2x128xf32> to vector<2x1x128xf32>
    %12 = vector.shape_cast %5 : vector<8x128xf32> to vector<1x8x128xf32>
    %13 = arith.subf %7, %5 : vector<8x128xf32>
    %14 = vector.shape_cast %13 : vector<8x128xf32> to vector<1x8x128xf32>
    %15 = arith.addf %5, %7 : vector<8x128xf32>
    %16 = vector.shape_cast %15 : vector<8x128xf32> to vector<1x8x128xf32>
    %17 = vector.broadcast %9 : vector<2x1x128xf32> to vector<2x8x128xf32>
    %18 = vector.broadcast %12 : vector<1x8x128xf32> to vector<2x8x128xf32>
    %19 = arith.mulf %17, %18 : vector<2x8x128xf32>
    %20 = vector.broadcast %10 : vector<2x1x128xf32> to vector<2x8x128xf32>
    %21 = vector.broadcast %14 : vector<1x8x128xf32> to vector<2x8x128xf32>
    %22 = arith.mulf %20, %21 : vector<2x8x128xf32>
    %23 = vector.broadcast %11 : vector<2x1x128xf32> to vector<2x8x128xf32>
    %24 = vector.broadcast %16 : vector<1x8x128xf32> to vector<2x8x128xf32>
    %25 = arith.mulf %23, %24 : vector<2x8x128xf32>
    %26 = arith.subf %19, %25 : vector<2x8x128xf32>
    %27 = arith.addf %19, %22 : vector<2x8x128xf32>
    %c0_15 = arith.constant 0 : index
    %c1 = arith.constant 1 : index
    %c0_16 = arith.constant 0 : index
    %c0_17 = arith.constant 0 : index
    %28 = vector.load %arg3[%c0_15, %c1, %c0_16, %c0_17] : memref<1x4x2x128xf32, #tpu.memory_space<vmem>>, vector<1x1x2x128xf32>
    %29 = vector.shape_cast %28 : vector<1x1x2x128xf32> to vector<2x128xf32>
    %c0_18 = arith.constant 0 : index
    %c1_19 = arith.constant 1 : index
    %c0_20 = arith.constant 0 : index
    %c0_21 = arith.constant 0 : index
    %30 = vector.load %arg4[%c0_18, %c1_19, %c0_20, %c0_21] : memref<1x4x2x128xf32, #tpu.memory_space<vmem>>, vector<1x1x2x128xf32>
    %31 = vector.shape_cast %30 : vector<1x1x2x128xf32> to vector<2x128xf32>
    %c0_22 = arith.constant 0 : index
    %c1_23 = arith.constant 1 : index
    %c0_24 = arith.constant 0 : index
    %c0_25 = arith.constant 0 : index
    %32 = vector.load %arg5[%c0_22, %c1_23, %c0_24, %c0_25] : memref<1x4x8x128xf32, #tpu.memory_space<vmem>>, vector<1x1x8x128xf32>
    %33 = vector.shape_cast %32 : vector<1x1x8x128xf32> to vector<8x128xf32>
    %c0_26 = arith.constant 0 : index
    %c1_27 = arith.constant 1 : index
    %c0_28 = arith.constant 0 : index
    %c0_29 = arith.constant 0 : index
    %34 = vector.load %arg6[%c0_26, %c1_27, %c0_28, %c0_29] : memref<1x4x8x128xf32, #tpu.memory_space<vmem>>, vector<1x1x8x128xf32>
    %35 = vector.shape_cast %34 : vector<1x1x8x128xf32> to vector<8x128xf32>
    %36 = arith.addf %29, %31 : vector<2x128xf32>
    %37 = vector.shape_cast %36 : vector<2x128xf32> to vector<2x1x128xf32>
    %38 = vector.shape_cast %29 : vector<2x128xf32> to vector<2x1x128xf32>
    %39 = vector.shape_cast %31 : vector<2x128xf32> to vector<2x1x128xf32>
    %40 = vector.shape_cast %33 : vector<8x128xf32> to vector<1x8x128xf32>
    %41 = arith.subf %35, %33 : vector<8x128xf32>
    %42 = vector.shape_cast %41 : vector<8x128xf32> to vector<1x8x128xf32>
    %43 = arith.addf %33, %35 : vector<8x128xf32>
    %44 = vector.shape_cast %43 : vector<8x128xf32> to vector<1x8x128xf32>
    %45 = vector.broadcast %37 : vector<2x1x128xf32> to vector<2x8x128xf32>
    %46 = vector.broadcast %40 : vector<1x8x128xf32> to vector<2x8x128xf32>
    %47 = arith.mulf %45, %46 : vector<2x8x128xf32>
    %48 = vector.broadcast %38 : vector<2x1x128xf32> to vector<2x8x128xf32>
    %49 = vector.broadcast %42 : vector<1x8x128xf32> to vector<2x8x128xf32>
    %50 = arith.mulf %48, %49 : vector<2x8x128xf32>
    %51 = vector.broadcast %39 : vector<2x1x128xf32> to vector<2x8x128xf32>
    %52 = vector.broadcast %44 : vector<1x8x128xf32> to vector<2x8x128xf32>
    %53 = arith.mulf %51, %52 : vector<2x8x128xf32>
    %54 = arith.subf %47, %53 : vector<2x8x128xf32>
    %55 = arith.addf %47, %50 : vector<2x8x128xf32>
    %56 = arith.addf %26, %54 : vector<2x8x128xf32>
    %57 = arith.addf %27, %55 : vector<2x8x128xf32>
    %c0_30 = arith.constant 0 : index
    %c2 = arith.constant 2 : index
    %c0_31 = arith.constant 0 : index
    %c0_32 = arith.constant 0 : index
    %58 = vector.load %arg3[%c0_30, %c2, %c0_31, %c0_32] : memref<1x4x2x128xf32, #tpu.memory_space<vmem>>, vector<1x1x2x128xf32>
    %59 = vector.shape_cast %58 : vector<1x1x2x128xf32> to vector<2x128xf32>
    %c0_33 = arith.constant 0 : index
    %c2_34 = arith.constant 2 : index
    %c0_35 = arith.constant 0 : index
    %c0_36 = arith.constant 0 : index
    %60 = vector.load %arg4[%c0_33, %c2_34, %c0_35, %c0_36] : memref<1x4x2x128xf32, #tpu.memory_space<vmem>>, vector<1x1x2x128xf32>
    %61 = vector.shape_cast %60 : vector<1x1x2x128xf32> to vector<2x128xf32>
    %c0_37 = arith.constant 0 : index
    %c2_38 = arith.constant 2 : index
    %c0_39 = arith.constant 0 : index
    %c0_40 = arith.constant 0 : index
    %62 = vector.load %arg5[%c0_37, %c2_38, %c0_39, %c0_40] : memref<1x4x8x128xf32, #tpu.memory_space<vmem>>, vector<1x1x8x128xf32>
    %63 = vector.shape_cast %62 : vector<1x1x8x128xf32> to vector<8x128xf32>
    %c0_41 = arith.constant 0 : index
    %c2_42 = arith.constant 2 : index
    %c0_43 = arith.constant 0 : index
    %c0_44 = arith.constant 0 : index
    %64 = vector.load %arg6[%c0_41, %c2_42, %c0_43, %c0_44] : memref<1x4x8x128xf32, #tpu.memory_space<vmem>>, vector<1x1x8x128xf32>
    %65 = vector.shape_cast %64 : vector<1x1x8x128xf32> to vector<8x128xf32>
    %66 = arith.addf %59, %61 : vector<2x128xf32>
    %67 = vector.shape_cast %66 : vector<2x128xf32> to vector<2x1x128xf32>
    %68 = vector.shape_cast %59 : vector<2x128xf32> to vector<2x1x128xf32>
    %69 = vector.shape_cast %61 : vector<2x128xf32> to vector<2x1x128xf32>
    %70 = vector.shape_cast %63 : vector<8x128xf32> to vector<1x8x128xf32>
    %71 = arith.subf %65, %63 : vector<8x128xf32>
    %72 = vector.shape_cast %71 : vector<8x128xf32> to vector<1x8x128xf32>
    %73 = arith.addf %63, %65 : vector<8x128xf32>
    %74 = vector.shape_cast %73 : vector<8x128xf32> to vector<1x8x128xf32>
    %75 = vector.broadcast %67 : vector<2x1x128xf32> to vector<2x8x128xf32>
    %76 = vector.broadcast %70 : vector<1x8x128xf32> to vector<2x8x128xf32>
    %77 = arith.mulf %75, %76 : vector<2x8x128xf32>
    %78 = vector.broadcast %68 : vector<2x1x128xf32> to vector<2x8x128xf32>
    %79 = vector.broadcast %72 : vector<1x8x128xf32> to vector<2x8x128xf32>
    %80 = arith.mulf %78, %79 : vector<2x8x128xf32>
    %81 = vector.broadcast %69 : vector<2x1x128xf32> to vector<2x8x128xf32>
    %82 = vector.broadcast %74 : vector<1x8x128xf32> to vector<2x8x128xf32>
    %83 = arith.mulf %81, %82 : vector<2x8x128xf32>
    %84 = arith.subf %77, %83 : vector<2x8x128xf32>
    %85 = arith.addf %77, %80 : vector<2x8x128xf32>
    %86 = arith.addf %56, %84 : vector<2x8x128xf32>
    %87 = arith.addf %57, %85 : vector<2x8x128xf32>
    %c0_45 = arith.constant 0 : index
    %c3 = arith.constant 3 : index
    %c0_46 = arith.constant 0 : index
    %c0_47 = arith.constant 0 : index
    %88 = vector.load %arg3[%c0_45, %c3, %c0_46, %c0_47] : memref<1x4x2x128xf32, #tpu.memory_space<vmem>>, vector<1x1x2x128xf32>
    %89 = vector.shape_cast %88 : vector<1x1x2x128xf32> to vector<2x128xf32>
    %c0_48 = arith.constant 0 : index
    %c3_49 = arith.constant 3 : index
    %c0_50 = arith.constant 0 : index
    %c0_51 = arith.constant 0 : index
    %90 = vector.load %arg4[%c0_48, %c3_49, %c0_50, %c0_51] : memref<1x4x2x128xf32, #tpu.memory_space<vmem>>, vector<1x1x2x128xf32>
    %91 = vector.shape_cast %90 : vector<1x1x2x128xf32> to vector<2x128xf32>
    %c0_52 = arith.constant 0 : index
    %c3_53 = arith.constant 3 : index
    %c0_54 = arith.constant 0 : index
    %c0_55 = arith.constant 0 : index
    %92 = vector.load %arg5[%c0_52, %c3_53, %c0_54, %c0_55] : memref<1x4x8x128xf32, #tpu.memory_space<vmem>>, vector<1x1x8x128xf32>
    %93 = vector.shape_cast %92 : vector<1x1x8x128xf32> to vector<8x128xf32>
    %c0_56 = arith.constant 0 : index
    %c3_57 = arith.constant 3 : index
    %c0_58 = arith.constant 0 : index
    %c0_59 = arith.constant 0 : index
    %94 = vector.load %arg6[%c0_56, %c3_57, %c0_58, %c0_59] : memref<1x4x8x128xf32, #tpu.memory_space<vmem>>, vector<1x1x8x128xf32>
    %95 = vector.shape_cast %94 : vector<1x1x8x128xf32> to vector<8x128xf32>
    %96 = arith.addf %89, %91 : vector<2x128xf32>
    %97 = vector.shape_cast %96 : vector<2x128xf32> to vector<2x1x128xf32>
    %98 = vector.shape_cast %89 : vector<2x128xf32> to vector<2x1x128xf32>
    %99 = vector.shape_cast %91 : vector<2x128xf32> to vector<2x1x128xf32>
    %100 = vector.shape_cast %93 : vector<8x128xf32> to vector<1x8x128xf32>
    %101 = arith.subf %95, %93 : vector<8x128xf32>
    %102 = vector.shape_cast %101 : vector<8x128xf32> to vector<1x8x128xf32>
    %103 = arith.addf %93, %95 : vector<8x128xf32>
    %104 = vector.shape_cast %103 : vector<8x128xf32> to vector<1x8x128xf32>
    %105 = vector.broadcast %97 : vector<2x1x128xf32> to vector<2x8x128xf32>
    %106 = vector.broadcast %100 : vector<1x8x128xf32> to vector<2x8x128xf32>
    %107 = arith.mulf %105, %106 : vector<2x8x128xf32>
    %108 = vector.broadcast %98 : vector<2x1x128xf32> to vector<2x8x128xf32>
    %109 = vector.broadcast %102 : vector<1x8x128xf32> to vector<2x8x128xf32>
    %110 = arith.mulf %108, %109 : vector<2x8x128xf32>
    %111 = vector.broadcast %99 : vector<2x1x128xf32> to vector<2x8x128xf32>
    %112 = vector.broadcast %104 : vector<1x8x128xf32> to vector<2x8x128xf32>
    %113 = arith.mulf %111, %112 : vector<2x8x128xf32>
    %114 = arith.subf %107, %113 : vector<2x8x128xf32>
    %115 = arith.addf %107, %110 : vector<2x8x128xf32>
    %116 = arith.addf %86, %114 : vector<2x8x128xf32>
    %117 = arith.addf %87, %115 : vector<2x8x128xf32>
    %c0_60 = arith.constant 0 : index
    %c0_61 = arith.constant 0 : index
    %c0_62 = arith.constant 0 : index
    %c0_63 = arith.constant 0 : index
    %118 = vector.load %arg7[%c0_60, %c0_61, %c0_62, %c0_63] : memref<1x2x8x128xf32, #tpu.memory_space<vmem>>, vector<1x2x8x128xf32>
    %119 = vector.shape_cast %118 : vector<1x2x8x128xf32> to vector<2x8x128xf32>
    %120 = vector.shape_cast %116 : vector<2x8x128xf32> to vector<1x2x8x128xf32>
    tpu.vector_store %arg7[%c0_60, %c0_61, %c0_62, %c0_63], %120 {strides = array<i32>} : memref<1x2x8x128xf32, #tpu.memory_space<vmem>>, vector<1x2x8x128xf32>,
    %c0_64 = arith.constant 0 : index
    %c0_65 = arith.constant 0 : index
    %c0_66 = arith.constant 0 : index
    %c0_67 = arith.constant 0 : index
    %121 = vector.load %arg8[%c0_64, %c0_65, %c0_66, %c0_67] : memref<1x2x8x128xf32, #tpu.memory_space<vmem>>, vector<1x2x8x128xf32>
    %122 = vector.shape_cast %121 : vector<1x2x8x128xf32> to vector<2x8x128xf32>
    %123 = vector.shape_cast %117 : vector<2x8x128xf32> to vector<1x2x8x128xf32>
    tpu.vector_store %arg8[%c0_64, %c0_65, %c0_66, %c0_67], %123 {strides = array<i32>} : memref<1x2x8x128xf32, #tpu.memory_space<vmem>>, vector<1x2x8x128xf32>,
    return
  }
  func.func @transform_0(%arg0: i32, %arg1: i32, %arg2: i32) -> (i32, i32, i32, i32) {
    %c0_i32 = arith.constant 0 : i32
    %c0_i32_0 = arith.constant 0 : i32
    %c0_i32_1 = arith.constant 0 : i32
    return %arg0, %c0_i32, %c0_i32_0, %arg2 : i32, i32, i32, i32
  }
  func.func @transform_1(%arg0: i32, %arg1: i32, %arg2: i32) -> (i32, i32, i32, i32) {
    %c0_i32 = arith.constant 0 : i32
    %c0_i32_0 = arith.constant 0 : i32
    %c0_i32_1 = arith.constant 0 : i32
    return %arg0, %c0_i32, %c0_i32_0, %arg2 : i32, i32, i32, i32
  }
  func.func @transform_2(%arg0: i32, %arg1: i32, %arg2: i32) -> (i32, i32, i32, i32) {
    %c0_i32 = arith.constant 0 : i32
    %c0_i32_0 = arith.constant 0 : i32
    return %arg0, %c0_i32, %arg1, %arg2 : i32, i32, i32, i32
  }
  func.func @transform_3(%arg0: i32, %arg1: i32, %arg2: i32) -> (i32, i32, i32, i32) {
    %c0_i32 = arith.constant 0 : i32
    %c0_i32_0 = arith.constant 0 : i32
    return %arg0, %c0_i32, %arg1, %arg2 : i32, i32, i32, i32
  }
  func.func @transform_4(%arg0: i32, %arg1: i32, %arg2: i32) -> (i32, i32, i32, i32) {
    %c0_i32 = arith.constant 0 : i32
    %c0_i32_0 = arith.constant 0 : i32
    return %arg0, %c0_i32, %arg1, %arg2 : i32, i32, i32, i32
  }
  func.func @transform_5(%arg0: i32, %arg1: i32, %arg2: i32) -> (i32, i32, i32, i32) {
    %c0_i32 = arith.constant 0 : i32
    %c0_i32_0 = arith.constant 0 : i32
    return %arg0, %c0_i32, %arg1, %arg2 : i32, i32, i32, i32
  }
}

</mosaic_0001>

<llo_original>
// kernel: spectral_conv3d_fast.1
$region0: #{spectral_conv3d_fast.1}
  #allocation0 [shape = 'u32[]', space=smem, size = 0x4, offset = 0x4, fixed_abs, tag = 'smem constant byte address 0x4 - core index']
  #allocation1 [shape = 'u32[144,128]{1,0:T(1,128)}', space=vmem, size = 0x12000, scoped, tag = 'internal scratch']
  %s0 = inlined_call_operand.vmem [shape: f32[4,4,2,128], index: 0, kind: input, shape index: {}]
  %s1 = inlined_call_operand.vmem [shape: f32[4,4,2,128], index: 1, kind: input, shape index: {}]
  %s2 = inlined_call_operand.vmem [shape: f32[4,4,8,128], index: 2, kind: input, shape index: {}]
  %s3 = inlined_call_operand.vmem [shape: f32[4,4,8,128], index: 3, kind: input, shape index: {}]
  %s4 = inlined_call_operand.vmem [shape: f32[4,2,8,128], index: 4, kind: output, shape index: {0}]
  %s5 = inlined_call_operand.vmem [shape: f32[4,2,8,128], index: 5, kind: output, shape index: {1}]
  %6 = xla_tuple %s4, %s5
  %s7 = sld [smem:[#allocation0]]
  $region57: #{spectral_conv3d_fast.1} parent=0
    _
  %s9 = ssub.s32 1, %s7
  %s10 = scalar_select 0, %s9, %s7
  loop: start=0, step=1, limit=6
  $region2: #{spectral_conv3d_fast.1} parent=0 // loop_pre_header
    _
  $region3: #{spectral_conv3d_fast.1} parent=0 // loop_header
    %s12 = sphi 0, %s16
    %p13 = scmp.ge.s32.totalorder %s12, 6
    %s19 = sphi 0, %s38
    %s20 = sphi 0, %s34
    %s21 = sphi 0, %s30
    %s22 = sphi 0, %s19
    %s23 = sphi 0, %s20
    %s24 = sphi 0, %s21
    %s25 = sphi 0, %s22
    %s26 = sphi 0, %s23
    %s27 = sphi 0, %s24
    %s43 = sphi 0, %s45
    %s46 = sphi 0, %s43
    %s47 = sphi 0, %s46
    %s63 = sphi 0, %s47
    %s71 = sphi 0, %s73
    %s74 = sphi 0, %s71
    %s75 = sphi 0, %s74
    %s91 = sphi 0, %s75
    %s101 = sphi 0, %s103
    %s104 = sphi 0, %s101
    %s105 = sphi 0, %s104
    %s121 = sphi 0, %s105
    %s131 = sphi 0, %s133
    %s134 = sphi 0, %s131
    %s135 = sphi 0, %s134
    %s151 = sphi 0, %s135
    %s161 = sphi 0, %s163
    %s164 = sphi 0, %s161
    %s165 = sphi 0, %s164
    %s181 = sphi 0, %s165
    %s191 = sphi 0, %s193
    %s194 = sphi 0, %s191
    %s195 = sphi 0, %s194
    %s211 = sphi 0, %s195
  $region4: #{spectral_conv3d_fast.1} parent=0 // loop_header_branch
    %15 = sbr.rel (%p13) target = $region8
  $region5: #{spectral_conv3d_fast.1} parent=0 // loop_body
    %s17 = ssub.s32 %s12, 1
    %s18 = ssub.s32 %s12, 2
    %s28 = sadd.s32 1, %s21
    %p29 = scmp.ge.s32.totalorder %s28, 1
    %s30 = scalar_select %p29, 0, %s28
    %s31 = sadd.s32 1, %s20
    %s32 = scalar_select %p29, %s31, %s20
    %p33 = scmp.ge.s32.totalorder %s32, 1
    %s34 = scalar_select %p33, 0, %s32
    %s35 = sadd.s32 1, %s19
    %s36 = scalar_select %p33, %s35, %s19
    %p37 = scmp.ge.s32.totalorder %s36, 4
    %s38 = scalar_select %p37, 0, %s36
    %s39 = ssub.s32 %s19, %s38
    %s40 = ssub.s32 %s21, %s30
    %s41 = sor.u32 %s39, %s40
    %p42 = scmp.eq.s32.totalorder %s41, 0
    %s44 = sadd.s32 %s43, 1
    %s45 = scalar_select %p42, %s43, %s44
    %p48 = pneg %p42
    %p49 = scmp.eq.s32.totalorder %s12, 3
    %p50 = por %p48, %p49
    %p51 = scmp.ne.s32.totalorder %s43, %s46
    %p52 = scmp.eq.s32.totalorder %s12, 0
    %p53 = por %p51, %p52
    %p54 = scmp.ne.s32.totalorder %s43, %s46
    %p55 = scmp.eq.s32.totalorder %s17, 3
    %p56 = por %p54, %p55
    %p57 = scmp.ne.s32.totalorder %s46, %s47
    %p58 = scmp.eq.s32.totalorder %s17, 0
    %p59 = por %p57, %p58
    %p60 = scmp.ne.s32.totalorder %s46, %s47
    %p61 = scmp.eq.s32.totalorder %s18, 3
    %p62 = por %p60, %p61
    %p64 = scmp.ne.s32.totalorder %s47, %s63
    %p65 = scmp.eq.s32.totalorder %s18, 0
    %p66 = por %p64, %p65
    %s67 = ssub.s32 %s19, %s38
    %s68 = ssub.s32 %s21, %s30
    %s69 = sor.u32 %s67, %s68
    %p70 = scmp.eq.s32.totalorder %s69, 0
    %s72 = sadd.s32 %s71, 1
    %s73 = scalar_select %p70, %s71, %s72
    %p76 = pneg %p70
    %p77 = scmp.eq.s32.totalorder %s12, 3
    %p78 = por %p76, %p77
    %p79 = scmp.ne.s32.totalorder %s71, %s74
    %p80 = scmp.eq.s32.totalorder %s12, 0
    %p81 = por %p79, %p80
    %p82 = scmp.ne.s32.totalorder %s71, %s74
    %p83 = scmp.eq.s32.totalorder %s17, 3
    %p84 = por %p82, %p83
    %p85 = scmp.ne.s32.totalorder %s74, %s75
    %p86 = scmp.eq.s32.totalorder %s17, 0
    %p87 = por %p85, %p86
    %p88 = scmp.ne.s32.totalorder %s74, %s75
    %p89 = scmp.eq.s32.totalorder %s18, 3
    %p90 = por %p88, %p89
    %p92 = scmp.ne.s32.totalorder %s75, %s91
    %p93 = scmp.eq.s32.totalorder %s18, 0
    %p94 = por %p92, %p93
    %s95 = ssub.s32 %s19, %s38
    %s96 = ssub.s32 %s20, %s34
    %s97 = sor.u32 %s95, %s96
    %s98 = ssub.s32 %s21, %s30
    %s99 = sor.u32 %s97, %s98
    %p100 = scmp.eq.s32.totalorder %s99, 0
    %s102 = sadd.s32 %s101, 1
    %s103 = scalar_select %p100, %s101, %s102
    %p106 = pneg %p100
    %p107 = scmp.eq.s32.totalorder %s12, 3
    %p108 = por %p106, %p107
    %p109 = scmp.ne.s32.totalorder %s101, %s104
    %p110 = scmp.eq.s32.totalorder %s12, 0
    %p111 = por %p109, %p110
    %p112 = scmp.ne.s32.totalorder %s101, %s104
    %p113 = scmp.eq.s32.totalorder %s17, 3
    %p114 = por %p112, %p113
    %p115 = scmp.ne.s32.totalorder %s104, %s105
    %p116 = scmp.eq.s32.totalorder %s17, 0
    %p117 = por %p115, %p116
    %p118 = scmp.ne.s32.totalorder %s104, %s105
    %p119 = scmp.eq.s32.totalorder %s18, 3
    %p120 = por %p118, %p119
    %p122 = scmp.ne.s32.totalorder %s105, %s121
    %p123 = scmp.eq.s32.totalorder %s18, 0
    %p124 = por %p122, %p123
    %s125 = ssub.s32 %s19, %s38
    %s126 = ssub.s32 %s20, %s34
    %s127 = sor.u32 %s125, %s126
    %s128 = ssub.s32 %s21, %s30
    %s129 = sor.u32 %s127, %s128
    %p130 = scmp.eq.s32.totalorder %s129, 0
    %s132 = sadd.s32 %s131, 1
    %s133 = scalar_select %p130, %s131, %s132
    %p136 = pneg %p130
    %p137 = scmp.eq.s32.totalorder %s12, 3
    %p138 = por %p136, %p137
    %p139 = scmp.ne.s32.totalorder %s131, %s134
    %p140 = scmp.eq.s32.totalorder %s12, 0
    %p141 = por %p139, %p140
    %p142 = scmp.ne.s32.totalorder %s131, %s134
    %p143 = scmp.eq.s32.totalorder %s17, 3
    %p144 = por %p142, %p143
    %p145 = scmp.ne.s32.totalorder %s134, %s135
    %p146 = scmp.eq.s32.totalorder %s17, 0
    %p147 = por %p145, %p146
    %p148 = scmp.ne.s32.totalorder %s134, %s135
    %p149 = scmp.eq.s32.totalorder %s18, 3
    %p150 = por %p148, %p149
    %p152 = scmp.ne.s32.totalorder %s135, %s151
    %p153 = scmp.eq.s32.totalorder %s18, 0
    %p154 = por %p152, %p153
    %s155 = ssub.s32 %s19, %s38
    %s156 = ssub.s32 %s20, %s34
    %s157 = sor.u32 %s155, %s156
    %s158 = ssub.s32 %s21, %s30
    %s159 = sor.u32 %s157, %s158
    %p160 = scmp.eq.s32.totalorder %s159, 0
    %s162 = sadd.s32 %s161, 1
    %s163 = scalar_select %p160, %s161, %s162
    %p166 = pneg %p160
    %p167 = scmp.eq.s32.totalorder %s12, 3
    %p168 = por %p166, %p167
    %p169 = scmp.ne.s32.totalorder %s161, %s164
    %p170 = scmp.eq.s32.totalorder %s12, 0
    %p171 = por %p169, %p170
    %p172 = scmp.ne.s32.totalorder %s161, %s164
    %p173 = scmp.eq.s32.totalorder %s17, 3
    %p174 = por %p172, %p173
    %p175 = scmp.ne.s32.totalorder %s164, %s165
    %p176 = scmp.eq.s32.totalorder %s17, 0
    %p177 = por %p175, %p176
    %p178 = scmp.ne.s32.totalorder %s164, %s165
    %p179 = scmp.eq.s32.totalorder %s18, 3
    %p180 = por %p178, %p179
    %p182 = scmp.ne.s32.totalorder %s165, %s181
    %p183 = scmp.eq.s32.totalorder %s18, 0
    %p184 = por %p182, %p183
    %s185 = ssub.s32 %s19, %s38
    %s186 = ssub.s32 %s20, %s34
    %s187 = sor.u32 %s185, %s186
    %s188 = ssub.s32 %s21, %s30
    %s189 = sor.u32 %s187, %s188
    %p190 = scmp.eq.s32.totalorder %s189, 0
    %s192 = sadd.s32 %s191, 1
    %s193 = scalar_select %p190, %s191, %s192
    %p196 = pneg %p190
    %p197 = scmp.eq.s32.totalorder %s12, 3
    %p198 = por %p196, %p197
    %p199 = scmp.ne.s32.totalorder %s191, %s194
    %p200 = scmp.eq.s32.totalorder %s12, 0
    %p201 = por %p199, %p200
    %p202 = scmp.ne.s32.totalorder %s191, %s194
    %p203 = scmp.eq.s32.totalorder %s17, 3
    %p204 = por %p202, %p203
    %p205 = scmp.ne.s32.totalorder %s194, %s195
    %p206 = scmp.eq.s32.totalorder %s17, 0
    %p207 = por %p205, %p206
    %p208 = scmp.ne.s32.totalorder %s194, %s195
    %p209 = scmp.eq.s32.totalorder %s18, 3
    %p210 = por %p208, %p209
    %p212 = scmp.ne.s32.totalorder %s195, %s211
    %p213 = scmp.eq.s32.totalorder %s18, 0
    %p214 = por %p212, %p213
    %p215 = scmp.le.s32.totalorder 1, %s12
    %p216 = scmp.lt.s32.totalorder %s12, 5
    %p217 = pnand %p215, %p216
    %p218 = pneg %p217
    // Predicated region
    $region9: #{spectral_conv3d_fast.1} parent=5 // pred_check
      _
    $region10: #{spectral_conv3d_fast.1} parent=5 // pred_check_branch
      %220 = sbr.rel (%p217) target = $region12
    $region11: #{spectral_conv3d_fast.1} parent=5 // pred_region
      %s221 = ssub.s32 %s12, 1
    $region12: #{spectral_conv3d_fast.1} parent=5 // pred_fallthru
      _
    %p222 = scmp.lt.s32.totalorder %s12, 4
    // Predicated region
    $region13: #{spectral_conv3d_fast.1} parent=5 // pred_check
      %p223 = pneg %p222
    $region14: #{spectral_conv3d_fast.1} parent=5 // pred_check_branch
      %225 = sbr.rel (%p223) target = $region16
    $region15: #{spectral_conv3d_fast.1} parent=5 // pred_region
      // Predicated region
      $region17: #{spectral_conv3d_fast.1} parent=15 // pred_check
        %p226 = pneg %p53
      $region18: #{spectral_conv3d_fast.1} parent=15 // pred_check_branch
        %228 = sbr.rel (%p226) target = $region20
      $region19: #{spectral_conv3d_fast.1} parent=15 // pred_region
        %p229 = scmp.lt.s32.totalorder %s19, 3
        %s230 = scalar_select %p229, %s19, 3
        %p231 = scmp.lt.s32.totalorder %s21, 0
        %s232 = scalar_select %p231, %s21, 0
        %s233 = smul.addr %s230, 4
        %s234 = sadd.s32 %s232, %s233
        %s235 = smul.addr %s234, 2
        %s236 = scalar_lea.vmem %s0, %s235
      $region20: #{spectral_conv3d_fast.1} parent=15 // pred_fallthru
        _
      // Predicated region
      $region21: #{spectral_conv3d_fast.1} parent=15 // pred_check
        %p237 = pneg %p81
      $region22: #{spectral_conv3d_fast.1} parent=15 // pred_check_branch
        %239 = sbr.rel (%p237) target = $region24
      $region23: #{spectral_conv3d_fast.1} parent=15 // pred_region
        %p240 = scmp.lt.s32.totalorder %s19, 3
        %s241 = scalar_select %p240, %s19, 3
        %p242 = scmp.lt.s32.totalorder %s21, 0
        %s243 = scalar_select %p242, %s21, 0
        %s244 = smul.addr %s241, 4
        %s245 = sadd.s32 %s243, %s244
        %s246 = smul.addr %s245, 2
        %s247 = scalar_lea.vmem %s1, %s246
      $region24: #{spectral_conv3d_fast.1} parent=15 // pred_fallthru
        _
      // Predicated region
      $region25: #{spectral_conv3d_fast.1} parent=15 // pred_check
        %p248 = pneg %p111
      $region26: #{spectral_conv3d_fast.1} parent=15 // pred_check_branch
        %250 = sbr.rel (%p248) target = $region28
      $region27: #{spectral_conv3d_fast.1} parent=15 // pred_region
        %p251 = scmp.lt.s32.totalorder %s19, 3
        %s252 = scalar_select %p251, %s19, 3
        %p253 = scmp.lt.s32.totalorder %s20, 0
        %s254 = scalar_select %p253, %s20, 0
        %p255 = scmp.lt.s32.totalorder %s21, 0
        %s256 = scalar_select %p255, %s21, 0
        %s257 = sadd.s32 %s256, %s254
        %s258 = smul.addr %s252, 4
        %s259 = sadd.s32 %s257, %s258
        %s260 = smul.addr %s259, 8
        %s261 = scalar_lea.vmem %s2, %s260
      $region28: #{spectral_conv3d_fast.1} parent=15 // pred_fallthru
        _
      // Predicated region
      $region29: #{spectral_conv3d_fast.1} parent=15 // pred_check
        %p262 = pneg %p141
      $region30: #{spectral_conv3d_fast.1} parent=15 // pred_check_branch
        %264 = sbr.rel (%p262) target = $region32
      $region31: #{spectral_conv3d_fast.1} parent=15 // pred_region
        %p265 = scmp.lt.s32.totalorder %s19, 3
        %s266 = scalar_select %p265, %s19, 3
        %p267 = scmp.lt.s32.totalorder %s20, 0
        %s268 = scalar_select %p267, %s20, 0
        %p269 = scmp.lt.s32.totalorder %s21, 0
        %s270 = scalar_select %p269, %s21, 0
        %s271 = sadd.s32 %s270, %s268
        %s272 = smul.addr %s266, 4
        %s273 = sadd.s32 %s271, %s272
        %s274 = smul.addr %s273, 8
        %s275 = scalar_lea.vmem %s3, %s274
      $region32: #{spectral_conv3d_fast.1} parent=15 // pred_fallthru
        _
    $region16: #{spectral_conv3d_fast.1} parent=5 // pred_fallthru
      _
    %p276 = scmp.le.s32.totalorder 1, %s12
    %p277 = scmp.lt.s32.totalorder %s12, 5
    %p278 = pnand %p276, %p277
    %p279 = pneg %p278
    // Predicated region
    $region33: #{spectral_conv3d_fast.1} parent=5 // pred_check
      _
    $region34: #{spectral_conv3d_fast.1} parent=5 // pred_check_branch
      %281 = sbr.rel (%p278) target = $region36
    $region35: #{spectral_conv3d_fast.1} parent=5 // pred_region
      %s282 = ssub.s32 %s12, 1
      %p283 = scmp.lt.s32.totalorder %s22, 3
      %s284 = scalar_select %p283, %s22, 3
      %p285 = scmp.lt.s32.totalorder %s24, 0
      %s286 = scalar_select %p285, %s24, 0
      %s287 = smul.addr %s284, 4
      %s288 = sadd.s32 %s286, %s287
      %s289 = smul.addr %s288, 2
      %s290 = scalar_lea.vmem %s0, %s289
      %p291 = pneg %p59
      %p292 = pneg %p56
      %p293 = scmp.lt.s32.totalorder %s22, 3
      %s294 = scalar_select %p293, %s22, 3
      %p295 = scmp.lt.s32.totalorder %s24, 0
      %s296 = scalar_select %p295, %s24, 0
      %s297 = smul.addr %s294, 4
      %s298 = sadd.s32 %s296, %s297
      %s299 = smul.addr %s298, 2
      %s300 = scalar_lea.vmem %s1, %s299
      %p301 = pneg %p87
      %p302 = pneg %p84
      %p303 = scmp.lt.s32.totalorder %s22, 3
      %s304 = scalar_select %p303, %s22, 3
      %p305 = scmp.lt.s32.totalorder %s23, 0
      %s306 = scalar_select %p305, %s23, 0
      %p307 = scmp.lt.s32.totalorder %s24, 0
      %s308 = scalar_select %p307, %s24, 0
      %s309 = sadd.s32 %s308, %s306
      %s310 = smul.addr %s304, 4
      %s311 = sadd.s32 %s309, %s310
      %s312 = smul.addr %s311, 8
      %s313 = scalar_lea.vmem %s2, %s312
      %p314 = pneg %p117
      %p315 = pneg %p114
      %p316 = scmp.lt.s32.totalorder %s22, 3
      %s317 = scalar_select %p316, %s22, 3
      %p318 = scmp.lt.s32.totalorder %s23, 0
      %s319 = scalar_select %p318, %s23, 0
      %p320 = scmp.lt.s32.totalorder %s24, 0
      %s321 = scalar_select %p320, %s24, 0
      %s322 = sadd.s32 %s321, %s319
      %s323 = smul.addr %s317, 4
      %s324 = sadd.s32 %s322, %s323
      %s325 = smul.addr %s324, 8
      %s326 = scalar_lea.vmem %s3, %s325
      %p327 = pneg %p147
      %p328 = pneg %p144
      %p329 = pneg %p177
      %p330 = pneg %p174
      %p331 = scmp.lt.s32.totalorder %s22, 3
      %s332 = scalar_select %p331, %s22, 3
      %p333 = scmp.lt.s32.totalorder %s23, 0
      %s334 = scalar_select %p333, %s23, 0
      %p335 = scmp.lt.s32.totalorder %s24, 0
      %s336 = scalar_select %p335, %s24, 0
      %s337 = sadd.s32 %s336, %s334
      %s338 = smul.addr %s332, 2
      %s339 = sadd.s32 %s337, %s338
      %s340 = smul.addr %s339, 8
      %s341 = scalar_lea.vmem %s4, %s340
      %p342 = pneg %p207
      %p343 = pneg %p204
      %p344 = scmp.lt.s32.totalorder %s22, 3
      %s345 = scalar_select %p344, %s22, 3
      %p346 = scmp.lt.s32.totalorder %s23, 0
      %s347 = scalar_select %p346, %s23, 0
      %p348 = scmp.lt.s32.totalorder %s24, 0
      %s349 = scalar_select %p348, %s24, 0
      %s350 = sadd.s32 %s349, %s347
      %s351 = smul.addr %s345, 2
      %s352 = sadd.s32 %s350, %s351
      %s353 = smul.addr %s352, 8
      %s354 = scalar_lea.vmem %s5, %s353
      %p355 = scmp.lt.s32.totalorder %s22, 3
      %s356 = scalar_select %p355, %s22, 3
      %p357 = scmp.lt.s32.totalorder %s24, 0
      %s358 = scalar_select %p357, %s24, 0
      %s359 = smul.addr %s356, 4
      %s360 = sadd.s32 %s358, %s359
      %s361 = smul.addr %s360, 2
      %s362 = scalar_lea.vmem %s0, %s361
      %p363 = scmp.lt.s32.totalorder %s22, 3
      %s364 = scalar_select %p363, %s22, 3
      %p365 = scmp.lt.s32.totalorder %s24, 0
      %s366 = scalar_select %p365, %s24, 0
      %s367 = smul.addr %s364, 4
      %s368 = sadd.s32 %s366, %s367
      %s369 = smul.addr %s368, 2
      %s370 = scalar_lea.vmem %s1, %s369
      %p371 = scmp.lt.s32.totalorder %s22, 3
      %s372 = scalar_select %p371, %s22, 3
      %p373 = scmp.lt.s32.totalorder %s23, 0
      %s374 = scalar_select %p373, %s23, 0
      %p375 = scmp.lt.s32.totalorder %s24, 0
      %s376 = scalar_select %p375, %s24, 0
      %s377 = sadd.s32 %s376, %s374
      %s378 = smul.addr %s372, 4
      %s379 = sadd.s32 %s377, %s378
      %s380 = smul.addr %s379, 8
      %s381 = scalar_lea.vmem %s2, %s380
      %p382 = scmp.lt.s32.totalorder %s22, 3
      %s383 = scalar_select %p382, %s22, 3
      %p384 = scmp.lt.s32.totalorder %s23, 0
      %s385 = scalar_select %p384, %s23, 0
      %p386 = scmp.lt.s32.totalorder %s24, 0
      %s387 = scalar_select %p386, %s24, 0
      %s388 = sadd.s32 %s387, %s385
      %s389 = smul.addr %s383, 4
      %s390 = sadd.s32 %s388, %s389
      %s391 = smul.addr %s390, 8
      %s392 = scalar_lea.vmem %s3, %s391
      %p393 = scmp.lt.s32.totalorder %s22, 3
      %s394 = scalar_select %p393, %s22, 3
      %p395 = scmp.lt.s32.totalorder %s23, 0
      %s396 = scalar_select %p395, %s23, 0
      %p397 = scmp.lt.s32.totalorder %s24, 0
      %s398 = scalar_select %p397, %s24, 0
      %s399 = sadd.s32 %s398, %s396
      %s400 = smul.addr %s394, 2
      %s401 = sadd.s32 %s399, %s400
      %s402 = smul.addr %s401, 8
      %s403 = scalar_lea.vmem %s4, %s402
      %p404 = scmp.lt.s32.totalorder %s22, 3
      %s405 = scalar_select %p404, %s22, 3
      %p406 = scmp.lt.s32.totalorder %s23, 0
      %s407 = scalar_select %p406, %s23, 0
      %p408 = scmp.lt.s32.totalorder %s24, 0
      %s409 = scalar_select %p408, %s24, 0
      %s410 = sadd.s32 %s409, %s407
      %s411 = smul.addr %s405, 2
      %s412 = sadd.s32 %s410, %s411
      %s413 = smul.addr %s412, 8
      %s414 = scalar_lea.vmem %s5, %s413
      %v415 = vld [vmem:[%s362] sm:$0x3]
      %v416 = vld [vmem:[%s370] sm:$0x3]
      %v417 = vld [vmem:[%s381] sm:$0xff]
      %v418 = vld [vmem:[%s392] sm:$0xff]
      %v419 = vadd.f32 %v415, %v416
      %v422 = vunpack.c.l.s4 1966171168
      %v423 = vunpack.c.0.s8 %v422
      %v424 = vlaneseq
      %v425 = vshrl.u32 %v424, 7
      %v426 = vsub.s32 %v423, %v425
      %v427 = vrot.slane %v419, %v426
      %v428 = vcombine.high %v427, %v427
      %v430 = vunpack.c.l.s4 1966171168
      %v431 = vunpack.c.0.s8 %v430
      %v432 = vlaneseq
      %v433 = vshrl.u32 %v432, 7
      %v434 = vsub.s32 %v431, %v433
      %v435 = vrot.slane %v427, %v434
      %v437 = vunpack.c.l.s4 1966171168
      %v438 = vunpack.c.0.s8 %v437
      %v439 = vlaneseq
      %v440 = vshrl.u32 %v439, 7
      %v441 = vsub.s32 %v438, %v440
      %v442 = vrot.slane %v428, %v441
      %v445 = vunpack.c.l.s4 1966171168
      %v446 = vunpack.c.0.s8 %v445
      %v447 = vlaneseq
      %v448 = vshrl.u32 %v447, 7
      %v449 = vsub.s32 %v446, %v448
      %v450 = vrot.slane %v415, %v449
      %v451 = vcombine.high %v450, %v450
      %v453 = vunpack.c.l.s4 1966171168
      %v454 = vunpack.c.0.s8 %v453
      %v455 = vlaneseq
      %v456 = vshrl.u32 %v455, 7
      %v457 = vsub.s32 %v454, %v456
      %v458 = vrot.slane %v450, %v457
      %v460 = vunpack.c.l.s4 1966171168
      %v461 = vunpack.c.0.s8 %v460
      %v462 = vlaneseq
      %v463 = vshrl.u32 %v462, 7
      %v464 = vsub.s32 %v461, %v463
      %v465 = vrot.slane %v451, %v464
      %v468 = vunpack.c.l.s4 1966171168
      %v469 = vunpack.c.0.s8 %v468
      %v470 = vlaneseq
      %v471 = vshrl.u32 %v470, 7
      %v472 = vsub.s32 %v469, %v471
      %v473 = vrot.slane %v416, %v472
      %v474 = vcombine.high %v473, %v473
      %v476 = vunpack.c.l.s4 1966171168
      %v477 = vunpack.c.0.s8 %v476
      %v478 = vlaneseq
      %v479 = vshrl.u32 %v478, 7
      %v480 = vsub.s32 %v477, %v479
      %v481 = vrot.slane %v473, %v480
      %v483 = vunpack.c.l.s4 1966171168
      %v484 = vunpack.c.0.s8 %v483
      %v485 = vlaneseq
      %v486 = vshrl.u32 %v485, 7
      %v487 = vsub.s32 %v484, %v486
      %v488 = vrot.slane %v474, %v487
      %v489 = vsub.f32 %v418, %v417
      %v490 = vadd.f32 %v417, %v418
      %v491 = vlaneseq
      %v492 = vshrl.u32 %v491, 7
      %v493 = vsub.s32 0, %v492
      %v494 = vrot.slane %v435, %v493
      %v495 = vlaneseq
      %v496 = vshrl.u32 %v495, 7
      %v497 = vsub.s32 0, %v496
      %v498 = vrot.slane %v442, %v497
      %v501 = vmul.f32 %v494, %v417
      %v502 = vmul.f32 %v498, %v417
      %v503 = vlaneseq
      %v504 = vshrl.u32 %v503, 7
      %v505 = vsub.s32 0, %v504
      %v506 = vrot.slane %v458, %v505
      %v507 = vlaneseq
      %v508 = vshrl.u32 %v507, 7
      %v509 = vsub.s32 0, %v508
      %v510 = vrot.slane %v465, %v509
      %v513 = vmul.f32 %v506, %v489
      %v514 = vmul.f32 %v510, %v489
      %v515 = vlaneseq
      %v516 = vshrl.u32 %v515, 7
      %v517 = vsub.s32 0, %v516
      %v518 = vrot.slane %v481, %v517
      %v519 = vlaneseq
      %v520 = vshrl.u32 %v519, 7
      %v521 = vsub.s32 0, %v520
      %v522 = vrot.slane %v488, %v521
      %v525 = vmul.f32 %v518, %v490
      %v526 = vmul.f32 %v522, %v490
      %v527 = vsub.f32 %v501, %v525
      %v528 = vsub.f32 %v502, %v526
      %v529 = vadd.f32 %v501, %v513
      %v530 = vadd.f32 %v502, %v514
      %s531 = scalar_lea.vmem %s362, 2
      %v532 = vld [vmem:[%s531] sm:$0x3]
      %s533 = scalar_lea.vmem %s370, 2
      %v534 = vld [vmem:[%s533] sm:$0x3]
      %s535 = scalar_lea.vmem %s381, 8
      %v536 = vld [vmem:[%s535] sm:$0xff]
      %s537 = scalar_lea.vmem %s392, 8
      %v538 = vld [vmem:[%s537] sm:$0xff]
      %v539 = vadd.f32 %v532, %v534
      %v542 = vunpack.c.l.s4 1966171168
      %v543 = vunpack.c.0.s8 %v542
      %v544 = vlaneseq
      %v545 = vshrl.u32 %v544, 7
      %v546 = vsub.s32 %v543, %v545
      %v547 = vrot.slane %v539, %v546
      %v548 = vcombine.high %v547, %v547
      %v550 = vunpack.c.l.s4 1966171168
      %v551 = vunpack.c.0.s8 %v550
      %v552 = vlaneseq
      %v553 = vshrl.u32 %v552, 7
      %v554 = vsub.s32 %v551, %v553
      %v555 = vrot.slane %v547, %v554
      %v557 = vunpack.c.l.s4 1966171168
      %v558 = vunpack.c.0.s8 %v557
      %v559 = vlaneseq
      %v560 = vshrl.u32 %v559, 7
      %v561 = vsub.s32 %v558, %v560
      %v562 = vrot.slane %v548, %v561
      %v565 = vunpack.c.l.s4 1966171168
      %v566 = vunpack.c.0.s8 %v565
      %v567 = vlaneseq
      %v568 = vshrl.u32 %v567, 7
      %v569 = vsub.s32 %v566, %v568
      %v570 = vrot.slane %v532, %v569
      %v571 = vcombine.high %v570, %v570
      %v573 = vunpack.c.l.s4 1966171168
      %v574 = vunpack.c.0.s8 %v573
      %v575 = vlaneseq
      %v576 = vshrl.u32 %v575, 7
      %v577 = vsub.s32 %v574, %v576
      %v578 = vrot.slane %v570, %v577
      %v580 = vunpack.c.l.s4 1966171168
      %v581 = vunpack.c.0.s8 %v580
      %v582 = vlaneseq
      %v583 = vshrl.u32 %v582, 7
      %v584 = vsub.s32 %v581, %v583
      %v585 = vrot.slane %v571, %v584
      %v588 = vunpack.c.l.s4 1966171168
      %v589 = vunpack.c.0.s8 %v588
      %v590 = vlaneseq
      %v591 = vshrl.u32 %v590, 7
      %v592 = vsub.s32 %v589, %v591
      %v593 = vrot.slane %v534, %v592
      %v594 = vcombine.high %v593, %v593
      %v596 = vunpack.c.l.s4 1966171168
      %v597 = vunpack.c.0.s8 %v596
      %v598 = vlaneseq
      %v599 = vshrl.u32 %v598, 7
      %v600 = vsub.s32 %v597, %v599
      %v601 = vrot.slane %v593, %v600
      %v603 = vunpack.c.l.s4 1966171168
      %v604 = vunpack.c.0.s8 %v603
      %v605 = vlaneseq
      %v606 = vshrl.u32 %v605, 7
      %v607 = vsub.s32 %v604, %v606
      %v608 = vrot.slane %v594, %v607
      %v609 = vsub.f32 %v538, %v536
      %v610 = vadd.f32 %v536, %v538
      %v611 = vlaneseq
      %v612 = vshrl.u32 %v611, 7
      %v613 = vsub.s32 0, %v612
      %v614 = vrot.slane %v555, %v613
      %v615 = vlaneseq
      %v616 = vshrl.u32 %v615, 7
      %v617 = vsub.s32 0, %v616
      %v618 = vrot.slane %v562, %v617
      %v621 = vmul.f32 %v614, %v536
      %v622 = vmul.f32 %v618, %v536
      %v623 = vlaneseq
      %v624 = vshrl.u32 %v623, 7
      %v625 = vsub.s32 0, %v624
      %v626 = vrot.slane %v578, %v625
      %v627 = vlaneseq
      %v628 = vshrl.u32 %v627, 7
      %v629 = vsub.s32 0, %v628
      %v630 = vrot.slane %v585, %v629
      %v633 = vmul.f32 %v626, %v609
      %v634 = vmul.f32 %v630, %v609
      %v635 = vlaneseq
      %v636 = vshrl.u32 %v635, 7
      %v637 = vsub.s32 0, %v636
      %v638 = vrot.slane %v601, %v637
      %v639 = vlaneseq
      %v640 = vshrl.u32 %v639, 7
      %v641 = vsub.s32 0, %v640
      %v642 = vrot.slane %v608, %v641
      %v645 = vmul.f32 %v638, %v610
      %v646 = vmul.f32 %v642, %v610
      %v647 = vsub.f32 %v621, %v645
      %v648 = vsub.f32 %v622, %v646
      %v649 = vadd.f32 %v621, %v633
      %v650 = vadd.f32 %v622, %v634
      %v651 = vadd.f32 %v527, %v647
      %v652 = vadd.f32 %v528, %v648
      %v653 = vadd.f32 %v529, %v649
      %v654 = vadd.f32 %v530, %v650
      %s655 = scalar_lea.vmem %s362, 4
      %v656 = vld [vmem:[%s655] sm:$0x3]
      %s657 = scalar_lea.vmem %s370, 4
      %v658 = vld [vmem:[%s657] sm:$0x3]
      %s659 = scalar_lea.vmem %s381, 16
      %v660 = vld [vmem:[%s659] sm:$0xff]
      %s661 = scalar_lea.vmem %s392, 16
      %v662 = vld [vmem:[%s661] sm:$0xff]
      %v663 = vadd.f32 %v656, %v658
      %v666 = vunpack.c.l.s4 1966171168
      %v667 = vunpack.c.0.s8 %v666
      %v668 = vlaneseq
      %v669 = vshrl.u32 %v668, 7
      %v670 = vsub.s32 %v667, %v669
      %v671 = vrot.slane %v663, %v670
      %v672 = vcombine.high %v671, %v671
      %v674 = vunpack.c.l.s4 1966171168
      %v675 = vunpack.c.0.s8 %v674
      %v676 = vlaneseq
      %v677 = vshrl.u32 %v676, 7
      %v678 = vsub.s32 %v675, %v677
      %v679 = vrot.slane %v671, %v678
      %v681 = vunpack.c.l.s4 1966171168
      %v682 = vunpack.c.0.s8 %v681
      %v683 = vlaneseq
      %v684 = vshrl.u32 %v683, 7
      %v685 = vsub.s32 %v682, %v684
      %v686 = vrot.slane %v672, %v685
      %v689 = vunpack.c.l.s4 1966171168
      %v690 = vunpack.c.0.s8 %v689
      %v691 = vlaneseq
      %v692 = vshrl.u32 %v691, 7
      %v693 = vsub.s32 %v690, %v692
      %v694 = vrot.slane %v656, %v693
      %v695 = vcombine.high %v694, %v694
      %v697 = vunpack.c.l.s4 1966171168
      %v698 = vunpack.c.0.s8 %v697
      %v699 = vlaneseq
      %v700 = vshrl.u32 %v699, 7
      %v701 = vsub.s32 %v698, %v700
      %v702 = vrot.slane %v694, %v701
      %v704 = vunpack.c.l.s4 1966171168
      %v705 = vunpack.c.0.s8 %v704
      %v706 = vlaneseq
      %v707 = vshrl.u32 %v706, 7
      %v708 = vsub.s32 %v705, %v707
      %v709 = vrot.slane %v695, %v708
      %v712 = vunpack.c.l.s4 1966171168
      %v713 = vunpack.c.0.s8 %v712
      %v714 = vlaneseq
      %v715 = vshrl.u32 %v714, 7
      %v716 = vsub.s32 %v713, %v715
      %v717 = vrot.slane %v658, %v716
      %v718 = vcombine.high %v717, %v717
      %v720 = vunpack.c.l.s4 1966171168
      %v721 = vunpack.c.0.s8 %v720
      %v722 = vlaneseq
      %v723 = vshrl.u32 %v722, 7
      %v724 = vsub.s32 %v721, %v723
      %v725 = vrot.slane %v717, %v724
      %v727 = vunpack.c.l.s4 1966171168
      %v728 = vunpack.c.0.s8 %v727
      %v729 = vlaneseq
      %v730 = vshrl.u32 %v729, 7
      %v731 = vsub.s32 %v728, %v730
      %v732 = vrot.slane %v718, %v731
      %v733 = vsub.f32 %v662, %v660
      %v734 = vadd.f32 %v660, %v662
      %v735 = vlaneseq
      %v736 = vshrl.u32 %v735, 7
      %v737 = vsub.s32 0, %v736
      %v738 = vrot.slane %v679, %v737
      %v739 = vlaneseq
      %v740 = vshrl.u32 %v739, 7
      %v741 = vsub.s32 0, %v740
      %v742 = vrot.slane %v686, %v741
      %v745 = vmul.f32 %v738, %v660
      %v746 = vmul.f32 %v742, %v660
      %v747 = vlaneseq
      %v748 = vshrl.u32 %v747, 7
      %v749 = vsub.s32 0, %v748
      %v750 = vrot.slane %v702, %v749
      %v751 = vlaneseq
      %v752 = vshrl.u32 %v751, 7
      %v753 = vsub.s32 0, %v752
      %v754 = vrot.slane %v709, %v753
      %v757 = vmul.f32 %v750, %v733
      %v758 = vmul.f32 %v754, %v733
      %v759 = vlaneseq
      %v760 = vshrl.u32 %v759, 7
      %v761 = vsub.s32 0, %v760
      %v762 = vrot.slane %v725, %v761
      %v763 = vlaneseq
      %v764 = vshrl.u32 %v763, 7
      %v765 = vsub.s32 0, %v764
      %v766 = vrot.slane %v732, %v765
      %v769 = vmul.f32 %v762, %v734
      %v770 = vmul.f32 %v766, %v734
      %v771 = vsub.f32 %v745, %v769
      %v772 = vsub.f32 %v746, %v770
      %v773 = vadd.f32 %v745, %v757
      %v774 = vadd.f32 %v746, %v758
      %v775 = vadd.f32 %v651, %v771
      %v776 = vadd.f32 %v652, %v772
      %v777 = vadd.f32 %v653, %v773
      %v778 = vadd.f32 %v654, %v774
      %s779 = scalar_lea.vmem %s362, 6
      %v780 = vld [vmem:[%s779] sm:$0x3]
      %s781 = scalar_lea.vmem %s370, 6
      %v782 = vld [vmem:[%s781] sm:$0x3]
      %s783 = scalar_lea.vmem %s381, 24
      %v784 = vld [vmem:[%s783] sm:$0xff]
      %s785 = scalar_lea.vmem %s392, 24
      %v786 = vld [vmem:[%s785] sm:$0xff]
      %v787 = vadd.f32 %v780, %v782
      %v790 = vunpack.c.l.s4 1966171168
      %v791 = vunpack.c.0.s8 %v790
      %v792 = vlaneseq
      %v793 = vshrl.u32 %v792, 7
      %v794 = vsub.s32 %v791, %v793
      %v795 = vrot.slane %v787, %v794
      %v796 = vcombine.high %v795, %v795
      %v798 = vunpack.c.l.s4 1966171168
      %v799 = vunpack.c.0.s8 %v798
      %v800 = vlaneseq
      %v801 = vshrl.u32 %v800, 7
      %v802 = vsub.s32 %v799, %v801
      %v803 = vrot.slane %v795, %v802
      %v805 = vunpack.c.l.s4 1966171168
      %v806 = vunpack.c.0.s8 %v805
      %v807 = vlaneseq
      %v808 = vshrl.u32 %v807, 7
      %v809 = vsub.s32 %v806, %v808
      %v810 = vrot.slane %v796, %v809
      %v813 = vunpack.c.l.s4 1966171168
      %v814 = vunpack.c.0.s8 %v813
      %v815 = vlaneseq
      %v816 = vshrl.u32 %v815, 7
      %v817 = vsub.s32 %v814, %v816
      %v818 = vrot.slane %v780, %v817
      %v819 = vcombine.high %v818, %v818
      %v821 = vunpack.c.l.s4 1966171168
      %v822 = vunpack.c.0.s8 %v821
      %v823 = vlaneseq
      %v824 = vshrl.u32 %v823, 7
      %v825 = vsub.s32 %v822, %v824
      %v826 = vrot.slane %v818, %v825
      %v828 = vunpack.c.l.s4 1966171168
      %v829 = vunpack.c.0.s8 %v828
      %v830 = vlaneseq
      %v831 = vshrl.u32 %v830, 7
      %v832 = vsub.s32 %v829, %v831
      %v833 = vrot.slane %v819, %v832
      %v836 = vunpack.c.l.s4 1966171168
      %v837 = vunpack.c.0.s8 %v836
      %v838 = vlaneseq
      %v839 = vshrl.u32 %v838, 7
      %v840 = vsub.s32 %v837, %v839
      %v841 = vrot.slane %v782, %v840
      %v842 = vcombine.high %v841, %v841
      %v844 = vunpack.c.l.s4 1966171168
      %v845 = vunpack.c.0.s8 %v844
      %v846 = vlaneseq
      %v847 = vshrl.u32 %v846, 7
      %v848 = vsub.s32 %v845, %v847
      %v849 = vrot.slane %v841, %v848
      %v851 = vunpack.c.l.s4 1966171168
      %v852 = vunpack.c.0.s8 %v851
      %v853 = vlaneseq
      %v854 = vshrl.u32 %v853, 7
      %v855 = vsub.s32 %v852, %v854
      %v856 = vrot.slane %v842, %v855
      %v857 = vsub.f32 %v786, %v784
      %v858 = vadd.f32 %v784, %v786
      %v859 = vlaneseq
      %v860 = vshrl.u32 %v859, 7
      %v861 = vsub.s32 0, %v860
      %v862 = vrot.slane %v803, %v861
      %v863 = vlaneseq
      %v864 = vshrl.u32 %v863, 7
      %v865 = vsub.s32 0, %v864
      %v866 = vrot.slane %v810, %v865
      %v869 = vmul.f32 %v862, %v784
      %v870 = vmul.f32 %v866, %v784
      %v871 = vlaneseq
      %v872 = vshrl.u32 %v871, 7
      %v873 = vsub.s32 0, %v872
      %v874 = vrot.slane %v826, %v873
      %v875 = vlaneseq
      %v876 = vshrl.u32 %v875, 7
      %v877 = vsub.s32 0, %v876
      %v878 = vrot.slane %v833, %v877
      %v881 = vmul.f32 %v874, %v857
      %v882 = vmul.f32 %v878, %v857
      %v883 = vlaneseq
      %v884 = vshrl.u32 %v883, 7
      %v885 = vsub.s32 0, %v884
      %v886 = vrot.slane %v849, %v885
      %v887 = vlaneseq
      %v888 = vshrl.u32 %v887, 7
      %v889 = vsub.s32 0, %v888
      %v890 = vrot.slane %v856, %v889
      %v893 = vmul.f32 %v886, %v858
      %v894 = vmul.f32 %v890, %v858
      %v895 = vsub.f32 %v869, %v893
      %v896 = vsub.f32 %v870, %v894
      %v897 = vadd.f32 %v869, %v881
      %v898 = vadd.f32 %v870, %v882
      %v899 = vadd.f32 %v775, %v895
      %v900 = vadd.f32 %v776, %v896
      %v901 = vadd.f32 %v777, %v897
      %v902 = vadd.f32 %v778, %v898
      %903 = vst [vmem:[%s403] sm:$0xff] %v899
      %904 = vst [vmem:[%s403 + $0x8] sm:$0xff] %v900
      %905 = vst [vmem:[%s414] sm:$0xff] %v901
      %906 = vst [vmem:[%s414 + $0x8] sm:$0xff] %v902
      %p907 = scmp.lt.s32.totalorder %s22, 3
      %s908 = scalar_select %p907, %s22, 3
      %p909 = scmp.lt.s32.totalorder %s23, 0
      %s910 = scalar_select %p909, %s23, 0
      %p911 = scmp.lt.s32.totalorder %s24, 0
      %s912 = scalar_select %p911, %s24, 0
      %s913 = sadd.s32 %s912, %s910
      %s914 = smul.addr %s908, 2
      %s915 = sadd.s32 %s913, %s914
      %s916 = smul.addr %s915, 8
      %s917 = scalar_lea.vmem %s4, %s916
      %p918 = scmp.lt.s32.totalorder %s22, 3
      %s919 = scalar_select %p918, %s22, 3
      %p920 = scmp.lt.s32.totalorder %s23, 0
      %s921 = scalar_select %p920, %s23, 0
      %p922 = scmp.lt.s32.totalorder %s24, 0
      %s923 = scalar_select %p922, %s24, 0
      %s924 = sadd.s32 %s923, %s921
      %s925 = smul.addr %s919, 2
      %s926 = sadd.s32 %s924, %s925
      %s927 = smul.addr %s926, 8
      %s928 = scalar_lea.vmem %s5, %s927
      // Predicated region
      $region37: #{spectral_conv3d_fast.1} parent=35 // pred_check
        %p929 = pneg %p174
      $region38: #{spectral_conv3d_fast.1} parent=35 // pred_check_branch
        %931 = sbr.rel (%p929) target = $region40
      $region39: #{spectral_conv3d_fast.1} parent=35 // pred_region
        _
      $region40: #{spectral_conv3d_fast.1} parent=35 // pred_fallthru
        _
      // Predicated region
      $region41: #{spectral_conv3d_fast.1} parent=35 // pred_check
        %p932 = pneg %p204
      $region42: #{spectral_conv3d_fast.1} parent=35 // pred_check_branch
        %934 = sbr.rel (%p932) target = $region44
      $region43: #{spectral_conv3d_fast.1} parent=35 // pred_region
        _
      $region44: #{spectral_conv3d_fast.1} parent=35 // pred_fallthru
        _
    $region36: #{spectral_conv3d_fast.1} parent=5 // pred_fallthru
      _
    %p935 = scmp.le.s32.totalorder 2, %s12
    // Predicated region
    $region45: #{spectral_conv3d_fast.1} parent=5 // pred_check
      %p936 = pneg %p935
    $region46: #{spectral_conv3d_fast.1} parent=5 // pred_check_branch
      %938 = sbr.rel (%p936) target = $region48
    $region47: #{spectral_conv3d_fast.1} parent=5 // pred_region
      %s939 = ssub.s32 %s12, 2
      // Predicated region
      $region49: #{spectral_conv3d_fast.1} parent=47 // pred_check
        %p940 = pneg %p180
      $region50: #{spectral_conv3d_fast.1} parent=47 // pred_check_branch
        %942 = sbr.rel (%p940) target = $region52
      $region51: #{spectral_conv3d_fast.1} parent=47 // pred_region
        %p943 = scmp.lt.s32.totalorder %s25, 3
        %s944 = scalar_select %p943, %s25, 3
        %p945 = scmp.lt.s32.totalorder %s26, 0
        %s946 = scalar_select %p945, %s26, 0
        %p947 = scmp.lt.s32.totalorder %s27, 0
        %s948 = scalar_select %p947, %s27, 0
        %s949 = sadd.s32 %s948, %s946
        %s950 = smul.addr %s944, 2
        %s951 = sadd.s32 %s949, %s950
        %s952 = smul.addr %s951, 8
        %s953 = scalar_lea.vmem %s4, %s952
      $region52: #{spectral_conv3d_fast.1} parent=47 // pred_fallthru
        _
      // Predicated region
      $region53: #{spectral_conv3d_fast.1} parent=47 // pred_check
        %p954 = pneg %p210
      $region54: #{spectral_conv3d_fast.1} parent=47 // pred_check_branch
        %956 = sbr.rel (%p954) target = $region56
      $region55: #{spectral_conv3d_fast.1} parent=47 // pred_region
        %p957 = scmp.lt.s32.totalorder %s25, 3
        %s958 = scalar_select %p957, %s25, 3
        %p959 = scmp.lt.s32.totalorder %s26, 0
        %s960 = scalar_select %p959, %s26, 0
        %p961 = scmp.lt.s32.totalorder %s27, 0
        %s962 = scalar_select %p961, %s27, 0
        %s963 = sadd.s32 %s962, %s960
        %s964 = smul.addr %s958, 2
        %s965 = sadd.s32 %s963, %s964
        %s966 = smul.addr %s965, 8
        %s967 = scalar_lea.vmem %s5, %s966
      $region56: #{spectral_conv3d_fast.1} parent=47 // pred_fallthru
        _
    $region48: #{spectral_conv3d_fast.1} parent=5 // pred_fallthru
      _
  $region6: #{spectral_conv3d_fast.1} parent=0 // loop_footer
    %s16 = sadd.s32 1, %s12
  $region7: #{spectral_conv3d_fast.1} parent=0 // loop_footer_branch
    %11 = sbr.rel target = $region3
  $region8: #{spectral_conv3d_fast.1} parent=0 // loop_exit
    _

// kernel: reverse.1
$region0: #{reverse.1}
  #allocation0 [shape = 's32[1]{0}', space=sflag, size = 0x4, scoped, tag = 'scoped memory for reverse.1']
  %s0 = inlined_call_operand.vmem [shape: f32[2,4,16,16,7], index: 0, kind: input, shape index: {}]
  %s1 = inlined_call_operand.vmem [shape: f32[2,4,16,16,7], index: 1, kind: output, shape index: {}]
  %s2 = scalar_lea.vmem %s0, 96
  %v3 = vld [vmem:[%s2] sm:$0xff]
  %4 = vst [vmem:[%s1] sm:$0xff] %v3
  %s5 = scalar_lea.vmem %s0, 544
  %v6 = vld [vmem:[%s5] sm:$0xff]
  %s7 = scalar_lea.vmem %s1, 448
  %8 = vst [vmem:[%s7] sm:$0xff] %v6
  %s9 = scalar_lea.vmem %s0, 208
  %v10 = vld [vmem:[%s9] sm:$0xff]
  %s11 = scalar_lea.vmem %s1, 112
  %12 = vst [vmem:[%s11] sm:$0xff] %v10
  %s13 = scalar_lea.vmem %s0, 656
  %v14 = vld [vmem:[%s13] sm:$0xff]
  %s15 = scalar_lea.vmem %s1, 560
  %16 = vst [vmem:[%s15] sm:$0xff] %v14
  %s17 = scalar_lea.vmem %s0, 320
  %v18 = vld [vmem:[%s17] sm:$0xff]
  %s19 = scalar_lea.vmem %s1, 224
  %20 = vst [vmem:[%s19] sm:$0xff] %v18
  %s21 = scalar_lea.vmem %s0, 768
  %v22 = vld [vmem:[%s21] sm:$0xff]
  %s23 = scalar_lea.vmem %s1, 672
  %24 = vst [vmem:[%s23] sm:$0xff] %v22
  %s25 = scalar_lea.vmem %s0, 432
  %v26 = vld [vmem:[%s25] sm:$0xff]
  %s27 = scalar_lea.vmem %s1, 336
  %28 = vst [vmem:[%s27] sm:$0xff] %v26
  %s29 = scalar_lea.vmem %s0, 880
  %v30 = vld [vmem:[%s29] sm:$0xff]
  %s31 = scalar_lea.vmem %s1, 784
  %32 = vst [vmem:[%s31] sm:$0xff] %v30
  %s33 = scalar_lea.vmem %s0, 80
  %v34 = vld [vmem:[%s33] sm:$0xff]
  %s35 = scalar_lea.vmem %s1, 16
  %36 = vst [vmem:[%s35] sm:$0xff] %v34
  %s37 = scalar_lea.vmem %s0, 528
  %v38 = vld [vmem:[%s37] sm:$0xff]
  %s39 = scalar_lea.vmem %s1, 464
  %40 = vst [vmem:[%s39] sm:$0xff] %v38
  %s41 = scalar_lea.vmem %s0, 192
  %v42 = vld [vmem:[%s41] sm:$0xff]
  %s43 = scalar_lea.vmem %s1, 128
  %44 = vst [vmem:[%s43] sm:$0xff] %v42
  %s45 = scalar_lea.vmem %s0, 640
  %v46 = vld [vmem:[%s45] sm:$0xff]
  %s47 = scalar_lea.vmem %s1, 576
  %48 = vst [vmem:[%s47] sm:$0xff] %v46
  %s49 = scalar_lea.vmem %s0, 304
  %v50 = vld [vmem:[%s49] sm:$0xff]
  %s51 = scalar_lea.vmem %s1, 240
  %52 = vst [vmem:[%s51] sm:$0xff] %v50
  %s53 = scalar_lea.vmem %s0, 752
  %v54 = vld [vmem:[%s53] sm:$0xff]
  %s55 = scalar_lea.vmem %s1, 688
  %56 = vst [vmem:[%s55] sm:$0xff] %v54
  %s57 = scalar_lea.vmem %s0, 416
  %v58 = vld [vmem:[%s57] sm:$0xff]
  %s59 = scalar_lea.vmem %s1, 352
  %60 = vst [vmem:[%s59] sm:$0xff] %v58
  %s61 = scalar_lea.vmem %s0, 864
  %v62 = vld [vmem:[%s61] sm:$0xff]
  %s63 = scalar_lea.vmem %s1, 800
  %64 = vst [vmem:[%s63] sm:$0xff] %v62
  %s65 = scalar_lea.vmem %s0, 64
  %v66 = vld [vmem:[%s65] sm:$0xff]
  %s67 = scalar_lea.vmem %s1, 32
  %68 = vst [vmem:[%s67] sm:$0xff] %v66
  %s69 = scalar_lea.vmem %s0, 512
  %v70 = vld [vmem:[%s69] sm:$0xff]
  %s71 = scalar_lea.vmem %s1, 480
  %72 = vst [vmem:[%s71] sm:$0xff] %v70
  %s73 = scalar_lea.vmem %s0, 176
  %v74 = vld [vmem:[%s73] sm:$0xff]
  %s75 = scalar_lea.vmem %s1, 144
  %76 = vst [vmem:[%s75] sm:$0xff] %v74
  %s77 = scalar_lea.vmem %s0, 624
  %v78 = vld [vmem:[%s77] sm:$0xff]
  %s79 = scalar_lea.vmem %s1, 592
  %80 = vst [vmem:[%s79] sm:$0xff] %v78
  %s81 = scalar_lea.vmem %s0, 288
  %v82 = vld [vmem:[%s81] sm:$0xff]
  %s83 = scalar_lea.vmem %s1, 256
  %84 = vst [vmem:[%s83] sm:$0xff] %v82
  %s85 = scalar_lea.vmem %s0, 736
  %v86 = vld [vmem:[%s85] sm:$0xff]
  %s87 = scalar_lea.vmem %s1, 704
  %88 = vst [vmem:[%s87] sm:$0xff] %v86
  %s89 = scalar_lea.vmem %s0, 400
  %v90 = vld [vmem:[%s89] sm:$0xff]
  %s91 = scalar_lea.vmem %s1, 368
  %92 = vst [vmem:[%s91] sm:$0xff] %v90
  %s93 = scalar_lea.vmem %s0, 848
  %v94 = vld [vmem:[%s93] sm:$0xff]
  %s95 = scalar_lea.vmem %s1, 816
  %96 = vst [vmem:[%s95] sm:$0xff] %v94
  %s97 = scalar_lea.vmem %s0, 48
  %v98 = vld [vmem:[%s97] sm:$0xff]
  %s99 = scalar_lea.vmem %s1, 48
  %100 = vst [vmem:[%s99] sm:$0xff] %v98
  %s101 = scalar_lea.vmem %s0, 496
  %v102 = vld [vmem:[%s101] sm:$0xff]
  %s103 = scalar_lea.vmem %s1, 496
  %104 = vst [vmem:[%s103] sm:$0xff] %v102
  %s105 = scalar_lea.vmem %s0, 160
  %v106 = vld [vmem:[%s105] sm:$0xff]
  %s107 = scalar_lea.vmem %s1, 160
  %108 = vst [vmem:[%s107] sm:$0xff] %v106
  %s109 = scalar_lea.vmem %s0, 608
  %v110 = vld [vmem:[%s109] sm:$0xff]
  %s111 = scalar_lea.vmem %s1, 608
  %112 = vst [vmem:[%s111] sm:$0xff] %v110
  %s113 = scalar_lea.vmem %s0, 272
  %v114 = vld [vmem:[%s113] sm:$0xff]
  %s115 = scalar_lea.vmem %s1, 272
  %116 = vst [vmem:[%s115] sm:$0xff] %v114
  %s117 = scalar_lea.vmem %s0, 720
  %v118 = vld [vmem:[%s117] sm:$0xff]
  %s119 = scalar_lea.vmem %s1, 720
  %120 = vst [vmem:[%s119] sm:$0xff] %v118
  %s121 = scalar_lea.vmem %s0, 384
  %v122 = vld [vmem:[%s121] sm:$0xff]
  %s123 = scalar_lea.vmem %s1, 384
  %124 = vst [vmem:[%s123] sm:$0xff] %v122
  %s125 = scalar_lea.vmem %s0, 832
  %v126 = vld [vmem:[%s125] sm:$0xff]
  %s127 = scalar_lea.vmem %s1, 832
  %128 = vst [vmem:[%s127] sm:$0xff] %v126
  %s129 = scalar_lea.vmem %s0, 32
  %v130 = vld [vmem:[%s129] sm:$0xff]
  %s131 = scalar_lea.vmem %s1, 64
  %132 = vst [vmem:[%s131] sm:$0xff] %v130
  %s133 = scalar_lea.vmem %s0, 480
  %v134 = vld [vmem:[%s133] sm:$0xff]
  %s135 = scalar_lea.vmem %s1, 512
  %136 = vst [vmem:[%s135] sm:$0xff] %v134
  %s137 = scalar_lea.vmem %s0, 144
  %v138 = vld [vmem:[%s137] sm:$0xff]
  %s139 = scalar_lea.vmem %s1, 176
  %140 = vst [vmem:[%s139] sm:$0xff] %v138
  %s141 = scalar_lea.vmem %s0, 592
  %v142 = vld [vmem:[%s141] sm:$0xff]
  %s143 = scalar_lea.vmem %s1, 624
  %144 = vst [vmem:[%s143] sm:$0xff] %v142
  %s145 = scalar_lea.vmem %s0, 256
  %v146 = vld [vmem:[%s145] sm:$0xff]
  %s147 = scalar_lea.vmem %s1, 288
  %148 = vst [vmem:[%s147] sm:$0xff] %v146
  %s149 = scalar_lea.vmem %s0, 704
  %v150 = vld [vmem:[%s149] sm:$0xff]
  %s151 = scalar_lea.vmem %s1, 736
  %152 = vst [vmem:[%s151] sm:$0xff] %v150
  %s153 = scalar_lea.vmem %s0, 368
  %v154 = vld [vmem:[%s153] sm:$0xff]
  %s155 = scalar_lea.vmem %s1, 400
  %156 = vst [vmem:[%s155] sm:$0xff] %v154
  %s157 = scalar_lea.vmem %s0, 816
  %v158 = vld [vmem:[%s157] sm:$0xff]
  %s159 = scalar_lea.vmem %s1, 848
  %160 = vst [vmem:[%s159] sm:$0xff] %v158
  %s161 = scalar_lea.vmem %s0, 16
  %v162 = vld [vmem:[%s161] sm:$0xff]
  %s163 = scalar_lea.vmem %s1, 80
  %164 = vst [vmem:[%s163] sm:$0xff] %v162
  %s165 = scalar_lea.vmem %s0, 464
  %v166 = vld [vmem:[%s165] sm:$0xff]
  %s167 = scalar_lea.vmem %s1, 528
  %168 = vst [vmem:[%s167] sm:$0xff] %v166
  %s169 = scalar_lea.vmem %s0, 128
  %v170 = vld [vmem:[%s169] sm:$0xff]
  %s171 = scalar_lea.vmem %s1, 192
  %172 = vst [vmem:[%s171] sm:$0xff] %v170
  %s173 = scalar_lea.vmem %s0, 576
  %v174 = vld [vmem:[%s173] sm:$0xff]
  %s175 = scalar_lea.vmem %s1, 640
  %176 = vst [vmem:[%s175] sm:$0xff] %v174
  %s177 = scalar_lea.vmem %s0, 240
  %v178 = vld [vmem:[%s177] sm:$0xff]
  %s179 = scalar_lea.vmem %s1, 304
  %180 = vst [vmem:[%s179] sm:$0xff] %v178
  %s181 = scalar_lea.vmem %s0, 688
  %v182 = vld [vmem:[%s181] sm:$0xff]
  %s183 = scalar_lea.vmem %s1, 752
  %184 = vst [vmem:[%s183] sm:$0xff] %v182
  %s185 = scalar_lea.vmem %s0, 352
  %v186 = vld [vmem:[%s185] sm:$0xff]
  %s187 = scalar_lea.vmem %s1, 416
  %188 = vst [vmem:[%s187] sm:$0xff] %v186
  %s189 = scalar_lea.vmem %s0, 800
  %v190 = vld [vmem:[%s189] sm:$0xff]
  %s191 = scalar_lea.vmem %s1, 864
  %192 = vst [vmem:[%s191] sm:$0xff] %v190
  %v193 = vld [vmem:[%s0] sm:$0xff]
  %s194 = scalar_lea.vmem %s1, 96
  %195 = vst [vmem:[%s194] sm:$0xff] %v193
  %s196 = scalar_lea.vmem %s0, 448
  %v197 = vld [vmem:[%s196] sm:$0xff]
  %s198 = scalar_lea.vmem %s1, 544
  %199 = vst [vmem:[%s198] sm:$0xff] %v197
  %s200 = scalar_lea.vmem %s0, 112
  %v201 = vld [vmem:[%s200] sm:$0xff]
  %s202 = scalar_lea.vmem %s1, 208
  %203 = vst [vmem:[%s202] sm:$0xff] %v201
  %s204 = scalar_lea.vmem %s0, 560
  %v205 = vld [vmem:[%s204] sm:$0xff]
  %s206 = scalar_lea.vmem %s1, 656
  %207 = vst [vmem:[%s206] sm:$0xff] %v205
  %s208 = scalar_lea.vmem %s0, 224
  %v209 = vld [vmem:[%s208] sm:$0xff]
  %s210 = scalar_lea.vmem %s1, 320
  %211 = vst [vmem:[%s210] sm:$0xff] %v209
  %s212 = scalar_lea.vmem %s0, 672
  %v213 = vld [vmem:[%s212] sm:$0xff]
  %s214 = scalar_lea.vmem %s1, 768
  %215 = vst [vmem:[%s214] sm:$0xff] %v213
  %s216 = scalar_lea.vmem %s0, 336
  %v217 = vld [vmem:[%s216] sm:$0xff]
  %s218 = scalar_lea.vmem %s1, 432
  %219 = vst [vmem:[%s218] sm:$0xff] %v217
  %s220 = scalar_lea.vmem %s0, 784
  %v221 = vld [vmem:[%s220] sm:$0xff]
  %s222 = scalar_lea.vmem %s1, 880
  %223 = vst [vmem:[%s222] sm:$0xff] %v221
  %s224 = scalar_lea.vmem %s0, 104
  %v225 = vld [vmem:[%s224] sm:$0xff]
  %s226 = scalar_lea.vmem %s1, 8
  %227 = vst [vmem:[%s226] sm:$0xff] %v225
  %s228 = scalar_lea.vmem %s0, 552
  %v229 = vld [vmem:[%s228] sm:$0xff]
  %s230 = scalar_lea.vmem %s1, 456
  %231 = vst [vmem:[%s230] sm:$0xff] %v229
  %s232 = scalar_lea.vmem %s0, 216
  %v233 = vld [vmem:[%s232] sm:$0xff]
  %s234 = scalar_lea.vmem %s1, 120
  %235 = vst [vmem:[%s234] sm:$0xff] %v233
  %s236 = scalar_lea.vmem %s0, 664
  %v237 = vld [vmem:[%s236] sm:$0xff]
  %s238 = scalar_lea.vmem %s1, 568
  %239 = vst [vmem:[%s238] sm:$0xff] %v237
  %s240 = scalar_lea.vmem %s0, 328
  %v241 = vld [vmem:[%s240] sm:$0xff]
  %s242 = scalar_lea.vmem %s1, 232
  %243 = vst [vmem:[%s242] sm:$0xff] %v241
  %s244 = scalar_lea.vmem %s0, 776
  %v245 = vld [vmem:[%s244] sm:$0xff]
  %s246 = scalar_lea.vmem %s1, 680
  %247 = vst [vmem:[%s246] sm:$0xff] %v245
  %s248 = scalar_lea.vmem %s0, 440
  %v249 = vld [vmem:[%s248] sm:$0xff]
  %s250 = scalar_lea.vmem %s1, 344
  %251 = vst [vmem:[%s250] sm:$0xff] %v249
  %s252 = scalar_lea.vmem %s0, 888
  %v253 = vld [vmem:[%s252] sm:$0xff]
  %s254 = scalar_lea.vmem %s1, 792
  %255 = vst [vmem:[%s254] sm:$0xff] %v253
  %s256 = scalar_lea.vmem %s0, 88
  %v257 = vld [vmem:[%s256] sm:$0xff]
  %s258 = scalar_lea.vmem %s1, 24
  %259 = vst [vmem:[%s258] sm:$0xff] %v257
  %s260 = scalar_lea.vmem %s0, 536
  %v261 = vld [vmem:[%s260] sm:$0xff]
  %s262 = scalar_lea.vmem %s1, 472
  %263 = vst [vmem:[%s262] sm:$0xff] %v261
  %s264 = scalar_lea.vmem %s0, 200
  %v265 = vld [vmem:[%s264] sm:$0xff]
  %s266 = scalar_lea.vmem %s1, 136
  %267 = vst [vmem:[%s266] sm:$0xff] %v265
  %s268 = scalar_lea.vmem %s0, 648
  %v269 = vld [vmem:[%s268] sm:$0xff]
  %s270 = scalar_lea.vmem %s1, 584
  %271 = vst [vmem:[%s270] sm:$0xff] %v269
  %s272 = scalar_lea.vmem %s0, 312
  %v273 = vld [vmem:[%s272] sm:$0xff]
  %s274 = scalar_lea.vmem %s1, 248
  %275 = vst [vmem:[%s274] sm:$0xff] %v273
  %s276 = scalar_lea.vmem %s0, 760
  %v277 = vld [vmem:[%s276] sm:$0xff]
  %s278 = scalar_lea.vmem %s1, 696
  %279 = vst [vmem:[%s278] sm:$0xff] %v277
  %s280 = scalar_lea.vmem %s0, 424
  %v281 = vld [vmem:[%s280] sm:$0xff]
  %s282 = scalar_lea.vmem %s1, 360
  %283 = vst [vmem:[%s282] sm:$0xff] %v281
  %s284 = scalar_lea.vmem %s0, 872
  %v285 = vld [vmem:[%s284] sm:$0xff]
  %s286 = scalar_lea.vmem %s1, 808
  %287 = vst [vmem:[%s286] sm:$0xff] %v285
  %s288 = scalar_lea.vmem %s0, 72
  %v289 = vld [vmem:[%s288] sm:$0xff]
  %s290 = scalar_lea.vmem %s1, 40
  %291 = vst [vmem:[%s290] sm:$0xff] %v289
  %s292 = scalar_lea.vmem %s0, 520
  %v293 = vld [vmem:[%s292] sm:$0xff]
  %s294 = scalar_lea.vmem %s1, 488
  %295 = vst [vmem:[%s294] sm:$0xff] %v293
  %s296 = scalar_lea.vmem %s0, 184
  %v297 = vld [vmem:[%s296] sm:$0xff]
  %s298 = scalar_lea.vmem %s1, 152
  %299 = vst [vmem:[%s298] sm:$0xff] %v297
  %s300 = scalar_lea.vmem %s0, 632
  %v301 = vld [vmem:[%s300] sm:$0xff]
  %s302 = scalar_lea.vmem %s1, 600
  %303 = vst [vmem:[%s302] sm:$0xff] %v301
  %s304 = scalar_lea.vmem %s0, 296
  %v305 = vld [vmem:[%s304] sm:$0xff]
  %s306 = scalar_lea.vmem %s1, 264
  %307 = vst [vmem:[%s306] sm:$0xff] %v305
  %s308 = scalar_lea.vmem %s0, 744
  %v309 = vld [vmem:[%s308] sm:$0xff]
  %s310 = scalar_lea.vmem %s1, 712
  %311 = vst [vmem:[%s310] sm:$0xff] %v309
  %s312 = scalar_lea.vmem %s0, 408
  %v313 = vld [vmem:[%s312] sm:$0xff]
  %s314 = scalar_lea.vmem %s1, 376
  %315 = vst [vmem:[%s314] sm:$0xff] %v313
  %s316 = scalar_lea.vmem %s0, 856
  %v317 = vld [vmem:[%s316] sm:$0xff]
  %s318 = scalar_lea.vmem %s1, 824
  %319 = vst [vmem:[%s318] sm:$0xff] %v317
  %s320 = scalar_lea.vmem %s0, 56
  %v321 = vld [vmem:[%s320] sm:$0xff]
  %s322 = scalar_lea.vmem %s1, 56
  %323 = vst [vmem:[%s322] sm:$0xff] %v321
  %s324 = scalar_lea.vmem %s0, 504
  %v325 = vld [vmem:[%s324] sm:$0xff]
  %s326 = scalar_lea.vmem %s1, 504
  %327 = vst [vmem:[%s326] sm:$0xff] %v325
  %s328 = scalar_lea.vmem %s0, 168
  %v329 = vld [vmem:[%s328] sm:$0xff]
  %s330 = scalar_lea.vmem %s1, 168
  %331 = vst [vmem:[%s330] sm:$0xff] %v329
  %s332 = scalar_lea.vmem %s0, 616
  %v333 = vld [vmem:[%s332] sm:$0xff]
  %s334 = scalar_lea.vmem %s1, 616
  %335 = vst [vmem:[%s334] sm:$0xff] %v333
  %s336 = scalar_lea.vmem %s0, 280
  %v337 = vld [vmem:[%s336] sm:$0xff]
  %s338 = scalar_lea.vmem %s1, 280
  %339 = vst [vmem:[%s338] sm:$0xff] %v337
  %s340 = scalar_lea.vmem %s0, 728
  %v341 = vld [vmem:[%s340] sm:$0xff]
  %s342 = scalar_lea.vmem %s1, 728
  %343 = vst [vmem:[%s342] sm:$0xff] %v341
  %s344 = scalar_lea.vmem %s0, 392
  %v345 = vld [vmem:[%s344] sm:$0xff]
  %s346 = scalar_lea.vmem %s1, 392
  %347 = vst [vmem:[%s346] sm:$0xff] %v345
  %s348 = scalar_lea.vmem %s0, 840
  %v349 = vld [vmem:[%s348] sm:$0xff]
  %s350 = scalar_lea.vmem %s1, 840
  %351 = vst [vmem:[%s350] sm:$0xff] %v349
  %s352 = scalar_lea.vmem %s0, 40
  %v353 = vld [vmem:[%s352] sm:$0xff]
  %s354 = scalar_lea.vmem %s1, 72
  %355 = vst [vmem:[%s354] sm:$0xff] %v353
  %s356 = scalar_lea.vmem %s0, 488
  %v357 = vld [vmem:[%s356] sm:$0xff]
  %s358 = scalar_lea.vmem %s1, 520
  %359 = vst [vmem:[%s358] sm:$0xff] %v357
  %s360 = scalar_lea.vmem %s0, 152
  %v361 = vld [vmem:[%s360] sm:$0xff]
  %s362 = scalar_lea.vmem %s1, 184
  %363 = vst [vmem:[%s362] sm:$0xff] %v361
  %s364 = scalar_lea.vmem %s0, 600
  %v365 = vld [vmem:[%s364] sm:$0xff]
  %s366 = scalar_lea.vmem %s1, 632
  %367 = vst [vmem:[%s366] sm:$0xff] %v365
  %s368 = scalar_lea.vmem %s0, 264
  %v369 = vld [vmem:[%s368] sm:$0xff]
  %s370 = scalar_lea.vmem %s1, 296
  %371 = vst [vmem:[%s370] sm:$0xff] %v369
  %s372 = scalar_lea.vmem %s0, 712
  %v373 = vld [vmem:[%s372] sm:$0xff]
  %s374 = scalar_lea.vmem %s1, 744
  %375 = vst [vmem:[%s374] sm:$0xff] %v373
  %s376 = scalar_lea.vmem %s0, 376
  %v377 = vld [vmem:[%s376] sm:$0xff]
  %s378 = scalar_lea.vmem %s1, 408
  %379 = vst [vmem:[%s378] sm:$0xff] %v377
  %s380 = scalar_lea.vmem %s0, 824
  %v381 = vld [vmem:[%s380] sm:$0xff]
  %s382 = scalar_lea.vmem %s1, 856
  %383 = vst [vmem:[%s382] sm:$0xff] %v381
  %s384 = scalar_lea.vmem %s0, 24
  %v385 = vld [vmem:[%s384] sm:$0xff]
  %s386 = scalar_lea.vmem %s1, 88
  %387 = vst [vmem:[%s386] sm:$0xff] %v385
  %s388 = scalar_lea.vmem %s0, 472
  %v389 = vld [vmem:[%s388] sm:$0xff]
  %s390 = scalar_lea.vmem %s1, 536
  %391 = vst [vmem:[%s390] sm:$0xff] %v389
  %s392 = scalar_lea.vmem %s0, 136
  %v393 = vld [vmem:[%s392] sm:$0xff]
  %s394 = scalar_lea.vmem %s1, 200
  %395 = vst [vmem:[%s394] sm:$0xff] %v393
  %s396 = scalar_lea.vmem %s0, 584
  %v397 = vld [vmem:[%s396] sm:$0xff]
  %s398 = scalar_lea.vmem %s1, 648
  %399 = vst [vmem:[%s398] sm:$0xff] %v397
  %s400 = scalar_lea.vmem %s0, 248
  %v401 = vld [vmem:[%s400] sm:$0xff]
  %s402 = scalar_lea.vmem %s1, 312
  %403 = vst [vmem:[%s402] sm:$0xff] %v401
  %s404 = scalar_lea.vmem %s0, 696
  %v405 = vld [vmem:[%s404] sm:$0xff]
  %s406 = scalar_lea.vmem %s1, 760
  %407 = vst [vmem:[%s406] sm:$0xff] %v405
  %s408 = scalar_lea.vmem %s0, 360
  %v409 = vld [vmem:[%s408] sm:$0xff]
  %s410 = scalar_lea.vmem %s1, 424
  %411 = vst [vmem:[%s410] sm:$0xff] %v409
  %s412 = scalar_lea.vmem %s0, 808
  %v413 = vld [vmem:[%s412] sm:$0xff]
  %s414 = scalar_lea.vmem %s1, 872
  %415 = vst [vmem:[%s414] sm:$0xff] %v413
  %s416 = scalar_lea.vmem %s0, 8
  %v417 = vld [vmem:[%s416] sm:$0xff]
  %s418 = scalar_lea.vmem %s1, 104
  %419 = vst [vmem:[%s418] sm:$0xff] %v417
  %s420 = scalar_lea.vmem %s0, 456
  %v421 = vld [vmem:[%s420] sm:$0xff]
  %s422 = scalar_lea.vmem %s1, 552
  %423 = vst [vmem:[%s422] sm:$0xff] %v421
  %s424 = scalar_lea.vmem %s0, 120
  %v425 = vld [vmem:[%s424] sm:$0xff]
  %s426 = scalar_lea.vmem %s1, 216
  %427 = vst [vmem:[%s426] sm:$0xff] %v425
  %s428 = scalar_lea.vmem %s0, 568
  %v429 = vld [vmem:[%s428] sm:$0xff]
  %s430 = scalar_lea.vmem %s1, 664
  %431 = vst [vmem:[%s430] sm:$0xff] %v429
  %s432 = scalar_lea.vmem %s0, 232
  %v433 = vld [vmem:[%s432] sm:$0xff]
  %s434 = scalar_lea.vmem %s1, 328
  %435 = vst [vmem:[%s434] sm:$0xff] %v433
  %s436 = scalar_lea.vmem %s0, 680
  %v437 = vld [vmem:[%s436] sm:$0xff]
  %s438 = scalar_lea.vmem %s1, 776
  %439 = vst [vmem:[%s438] sm:$0xff] %v437
  %s440 = scalar_lea.vmem %s0, 344
  %v441 = vld [vmem:[%s440] sm:$0xff]
  %s442 = scalar_lea.vmem %s1, 440
  %443 = vst [vmem:[%s442] sm:$0xff] %v441
  %s444 = scalar_lea.vmem %s0, 792
  %v445 = vld [vmem:[%s444] sm:$0xff]
  %s446 = scalar_lea.vmem %s1, 888
  %447 = vst [vmem:[%s446] sm:$0xff] %v445

</llo_original>
